<compile_context>
chip_gen: v5e
topology: v5e:2x2
jax: 0.10.0
libtpu: 0.0.40
codegen_flags: <defaults>
</compile_context>

<pallas_src>
import jax
import jax.numpy as jnp
from jax.experimental import pallas as pl
from jax.experimental.pallas import tpu as pltpu

# ---------------- model config ----------------
NUM_BLOCKS = 2
IN_DIM = 16
HIDDEN_DIM = 32
OUT_DIM = 8
H4 = 4 * HIDDEN_DIM
USE_LAYER_NORM = True
LN_EPS = 1e-6
COMPUTE_DTYPE = jnp.bfloat16   # MXU operand dtype (f32 accumulation everywhere)
# TODO(synk): dropout (training mode) not implemented; eval-mode dropout is identity.

# ---------------- packed-parameter layout (static) ----------------
W_LANES = 128  # lane width of the weight pack (>= max fan-in = 4H = 128)


def _build_w_rows():
    rows = {}
    r = 0
    rows["w_in"] = (r, r + HIDDEN_DIM); r += HIDDEN_DIM
    rows["w1"] = []
    for _ in range(NUM_BLOCKS):
        rows["w1"].append((r, r + H4)); r += H4
    rows["w2"] = []
    for _ in range(NUM_BLOCKS):
        rows["w2"].append((r, r + HIDDEN_DIM)); r += HIDDEN_DIM
    rows["w_out"] = (r, r + OUT_DIM); r += OUT_DIM
    total = ((r + 7) // 8) * 8   # sublane-align
    return rows, total


_W_ROWS, W_PACK_ROWS = _build_w_rows()

# bias / LN pack: one f32 column per vector, features on sublanes
_BCOL_B_IN = 0
_BCOL_LN_S = tuple(1 + i for i in range(NUM_BLOCKS))
_BCOL_LN_B = tuple(1 + NUM_BLOCKS + i for i in range(NUM_BLOCKS))
_BCOL_B1 = tuple(1 + 2 * NUM_BLOCKS + i for i in range(NUM_BLOCKS))
_BCOL_B2 = tuple(1 + 3 * NUM_BLOCKS + i for i in range(NUM_BLOCKS))
_BCOL_B_OUT = 1 + 4 * NUM_BLOCKS
B_PACK_COLS = 2 + 4 * NUM_BLOCKS
B_PACK_ROWS = H4


def _silu(x):
    return x * jax.nn.sigmoid(x)


# ---------------- kernel ----------------
def mlp_resnet_kernel(x_ref, w_ref, b_ref, o_ref):
    H = HIDDEN_DIM

    # -- unpack parameters (static slices of the packed VMEM blocks) --
    r0, r1 = _W_ROWS["w_in"]
    w_in = w_ref[r0:r1, :IN_DIM].astype(COMPUTE_DTYPE)        # (H, IN_DIM) bf16
    r0, r1 = _W_ROWS["w_out"]
    w_out = w_ref[r0:r1, :H].astype(COMPUTE_DTYPE)            # (OUT_DIM, H) bf16
    b_in = b_ref[:H, _BCOL_B_IN:_BCOL_B_IN + 1]               # (H, 1) f32
    b_out = b_ref[:OUT_DIM, _BCOL_B_OUT:_BCOL_B_OUT + 1]      # (OUT_DIM, 1) f32

    # -- fused layout/dtype conversion: (TB, IN_DIM) f32 -> (IN_DIM, TB) bf16 --
    x_t = jnp.transpose(x_ref[...]).astype(COMPUTE_DTYPE)

    # input_proj:  h^T = W_in @ x^T + b_in   -> (H, TB), f32 accumulation
    h = jnp.dot(w_in, x_t, preferred_element_type=jnp.float32) + b_in

    # residual MLP blocks (static unroll; NUM_BLOCKS is small & fixed)
    for i in range(NUM_BLOCKS):
        r0, r1 = _W_ROWS["w1"][i]
        w1 = w_ref[r0:r1, :H].astype(COMPUTE_DTYPE)           # (4H, H) bf16
        r0, r1 = _W_ROWS["w2"][i]
        w2 = w_ref[r0:r1, :H4].astype(COMPUTE_DTYPE)          # (H, 4H) bf16
        c = _BCOL_B1[i]
        b1 = b_ref[:, c:c + 1]                                # (4H, 1) f32
        c = _BCOL_B2[i]
        b2 = b_ref[:H, c:c + 1]                               # (H, 1) f32

        residual = h
        y = h
        if USE_LAYER_NORM:
            c = _BCOL_LN_S[i]
            ln_s = b_ref[:H, c:c + 1]
            c = _BCOL_LN_B[i]
            ln_b = b_ref[:H, c:c + 1]
            # one-pass LayerNorm over the feature (sublane) axis, f32
            mean = jnp.mean(y, axis=0, keepdims=True)
            mean_sq = jnp.mean(y * y, axis=0, keepdims=True)
            var = jnp.maximum(mean_sq - mean * mean, 0.0)
            y = (y - mean) * jax.lax.rsqrt(var + LN_EPS)
            y = y * ln_s + ln_b
        y = jnp.dot(w1, y.astype(COMPUTE_DTYPE),
                    preferred_element_type=jnp.float32) + b1
        y = _silu(y)
        y = jnp.dot(w2, y.astype(COMPUTE_DTYPE),
                    preferred_element_type=jnp.float32) + b2
        h = residual + y

    # final activation + output_proj -> (OUT_DIM, TB)
    h = _silu(h)
    out = jnp.dot(w_out, h.astype(COMPUTE_DTYPE),
                  preferred_element_type=jnp.float32) + b_out
    # store directly in the caller's (batch, out_dim) layout & dtype
    o_ref[...] = jnp.transpose(out).astype(o_ref.dtype)


# ---------------- wrapper ----------------
def _chip_has_two_tensorcores():
    try:
        kind = jax.devices()[0].device_kind.lower()
    except Exception:
        return False
    return ("v7" in kind) or ("7x" in kind)


def _default_tile_b(B, dual_core):
    """Largest lane-dense tile; on dual-TC chips keep >= 2 steps for CORE_PARALLEL."""
    cap = 4096 if dual_core else 8192
    cands = [t for t in (8192, 4096, 2048, 1024, 512, 256, 128) if t <= cap]
    if dual_core:
        for t in cands:
            if B % t == 0 and B // t >= 2:
                return t
    for t in cands:
        if B % t == 0:
            return t
    return B   # small / odd batch: single full-batch block


def mlp_resnet_forward(x, w_pack, b_pack, *, tile_b=None):
    assert x.ndim == 2 and x.shape[1] == IN_DIM
    B = x.shape[0]
    dual_core = _chip_has_two_tensorcores()
    if tile_b is None:
        tile_b = _default_tile_b(B, dual_core)
    assert B % tile_b == 0, "tile_b must divide the batch"
    assert tile_b == B or tile_b % 128 == 0, (
        "tile_b must be a multiple of 128 (lane dim) unless it equals B"
    )

    n_steps = B // tile_b
    if dual_core and n_steps >= 2:
        sem = (getattr(pltpu, "CORE_PARALLEL", "parallel"),)
    else:
        sem = ("parallel",)

    return pl.pallas_call(
        mlp_resnet_kernel,
        out_shape=jax.ShapeDtypeStruct((B, OUT_DIM), x.dtype),
        grid_spec=pltpu.PrefetchScalarGridSpec(
            num_scalar_prefetch=0,
            grid=(n_steps,),
            in_specs=[
                pl.BlockSpec((tile_b, IN_DIM), lambda i: (i, 0)),          # x
                pl.BlockSpec((W_PACK_ROWS, W_LANES), lambda i: (0, 0)),    # weights
                pl.BlockSpec((B_PACK_ROWS, B_PACK_COLS), lambda i: (0, 0)),# bias/LN
            ],
            out_specs=pl.BlockSpec((tile_b, OUT_DIM), lambda i: (i, 0)),
        ),
        compiler_params=pltpu.CompilerParams(
            dimension_semantics=sem,
            vmem_limit_bytes=32 * 1024 * 1024,
        ),
    )(x, w_pack, b_pack)


# ---------------- parameters ----------------
def init_params(key):
    """Deterministic synthetic init (PyTorch-Linear-style uniform bounds), all f32,
    weights kept in PyTorch's native (out_features, in_features) layout."""
    H, NB = HIDDEN_DIM, NUM_BLOCKS
    keys = jax.random.split(key, 10)

    def lin(k, fan_in, shape):
        bound = 1.0 / (float(fan_in) ** 0.5)
        return jax.random.uniform(k, shape, jnp.float32, -bound, bound)

    w_in = lin(keys[0], IN_DIM, (H, IN_DIM))
    b_in = lin(keys[1], IN_DIM, (H,))
    ln_s = jnp.ones((NB, H), jnp.float32)
    ln_b = jnp.zeros((NB, H), jnp.float32)
    w1 = lin(keys[2], H, (NB, H4, H))
    b1 = lin(keys[3], H, (NB, H4))
    w2 = lin(keys[4], H4, (NB, H, H4))
    b2 = lin(keys[5], H4, (NB, H))
    w_out = lin(keys[6], H, (OUT_DIM, H))
    b_out = lin(keys[7], H, (OUT_DIM,))
    return (w_in, b_in, ln_s, ln_b, w1, b1, w2, b2, w_out, b_out)


def pack_params(params):
    """One-time packing of the 10 small tensors into 2 kernel inputs (both f32)."""
    (w_in, b_in, ln_s, ln_b, w1, b1, w2, b2, w_out, b_out) = params
    H = HIDDEN_DIM

    w_pack = jnp.zeros((W_PACK_ROWS, W_LANES), jnp.float32)
    r0, r1 = _W_ROWS["w_in"]
    w_pack = w_pack.at[r0:r1, :IN_DIM].set(w_in)
    for i in range(NUM_BLOCKS):
        r0, r1 = _W_ROWS["w1"][i]
        w_pack = w_pack.at[r0:r1, :H].set(w1[i])
        r0, r1 = _W_ROWS["w2"][i]
        w_pack = w_pack.at[r0:r1, :H4].set(w2[i])
    r0, r1 = _W_ROWS["w_out"]
    w_pack = w_pack.at[r0:r1, :H].set(w_out)

    b_pack = jnp.zeros((B_PACK_ROWS, B_PACK_COLS), jnp.float32)
    b_pack = b_pack.at[:H, _BCOL_B_IN].set(b_in)
    b_pack = b_pack.at[:OUT_DIM, _BCOL_B_OUT].set(b_out)
    for i in range(NUM_BLOCKS):
        b_pack = b_pack.at[:H, _BCOL_LN_S[i]].set(ln_s[i])
        b_pack = b_pack.at[:H, _BCOL_LN_B[i]].set(ln_b[i])
        b_pack = b_pack.at[:, _BCOL_B1[i]].set(b1[i])
        b_pack = b_pack.at[:H, _BCOL_B2[i]].set(b2[i])
    return w_pack, b_pack


# ---------------- pure-JAX reference ----------------
def mlp_resnet_ref(x, params):
    """Reference of the PyTorch forward (eval mode), mirroring the kernel's
    precision policy (bf16 matmul operands, f32 accumulation / LN / SiLU)."""
    (w_in, b_in, ln_s, ln_b, w1, b1, w2, b2, w_out, b_out) = params
    cd = COMPUTE_DTYPE
    h = jnp.dot(x.astype(cd), w_in.astype(cd).T,
                preferred_element_type=jnp.float32) + b_in
    for i in range(NUM_BLOCKS):
        residual = h
        y = h
        if USE_LAYER_NORM:
            mean = jnp.mean(y, axis=-1, keepdims=True)
            var = jnp.mean((y - mean) ** 2, axis=-1, keepdims=True)
            y = (y - mean) * jax.lax.rsqrt(var + LN_EPS)
            y = y * ln_s[i] + ln_b[i]
        y = jnp.dot(y.astype(cd), w1[i].astype(cd).T,
                    preferred_element_type=jnp.float32) + b1[i]
        y = _silu(y)
        y = jnp.dot(y.astype(cd), w2[i].astype(cd).T,
                    preferred_element_type=jnp.float32) + b2[i]
        h = residual + y
    h = _silu(h)
    return jnp.dot(h.astype(cd), w_out.astype(cd).T,
                   preferred_element_type=jnp.float32) + b_out


if __name__ == "__main__":
    key = jax.random.PRNGKey(0)
    k_x, k_p = jax.random.split(key)
    params = init_params(k_p)
    w_pack, b_pack = pack_params(params)

    # Main path: B=256 (single 256-wide block on 1-TC chips; 2x128 CORE_PARALLEL on v7x).
    B = 256
    x = jax.random.normal(k_x, (B, IN_DIM), jnp.float32)
    out = jax.block_until_ready(mlp_resnet_forward(x, w_pack, b_pack))
    ref = mlp_resnet_ref(x, params)
    assert out.shape == (B, OUT_DIM)
    assert jnp.allclose(out, ref, atol=2e-3, rtol=2e-3), (
        f"max abs err {jnp.max(jnp.abs(out - ref))}"
    )

    # Small-batch fallback path (single full-batch block, masked lanes but correct).
    x_small = jax.random.normal(jax.random.PRNGKey(1), (8, IN_DIM), jnp.float32)
    out_small = jax.block_until_ready(mlp_resnet_forward(x_small, w_pack, b_pack))
    ref_small = mlp_resnet_ref(x_small, params)
    assert out_small.shape == (8, OUT_DIM)
    assert jnp.allclose(out_small, ref_small, atol=2e-3, rtol=2e-3), (
        f"max abs err {jnp.max(jnp.abs(out_small - ref_small))}"
    )

    print("KERNEL_OK")
</pallas_src>

<mosaic_0001>
module attributes {stable_mosaic.version = 11 : i64} {
  func.func @mlp_resnet_kernel(%arg0: i32, %arg1: memref<256x16xf32, #tpu.memory_space<vmem>>, %arg2: memref<360x128xf32, #tpu.memory_space<vmem>>, %arg3: memref<128x10xf32, #tpu.memory_space<vmem>>, %arg4: memref<256x8xf32, #tpu.memory_space<vmem>>) attributes {dimension_semantics = [#tpu.dimension_semantics<parallel>], iteration_bounds = array<i64: 1>, scalar_prefetch = 0 : i64, scratch_operands = 0 : i64, tpu.core_type = #tpu.core_type<tc>, window_params = [{transform_indices = @transform_0, window_bounds = array<i64: 256, 16>}, {pipeline_mode = #tpu.pipeline_mode<synchronous>, transform_indices = @transform_1, window_bounds = array<i64: 360, 128>}, {pipeline_mode = #tpu.pipeline_mode<synchronous>, transform_indices = @transform_2, window_bounds = array<i64: 128, 10>}, {transform_indices = @transform_3, window_bounds = array<i64: 256, 8>}]} {
    %c0 = arith.constant 0 : index
    %c0_0 = arith.constant 0 : index
    %0 = vector.load %arg2[%c0, %c0_0] : memref<360x128xf32, #tpu.memory_space<vmem>>, vector<32x16xf32>
    %1 = arith.truncf %0 : vector<32x16xf32> to vector<32x16xbf16>
    %c352 = arith.constant 352 : index
    %c0_1 = arith.constant 0 : index
    %2 = vector.load %arg2[%c352, %c0_1] : memref<360x128xf32, #tpu.memory_space<vmem>>, vector<8x32xf32>
    %3 = arith.truncf %2 : vector<8x32xf32> to vector<8x32xbf16>
    %c0_2 = arith.constant 0 : index
    %c0_3 = arith.constant 0 : index
    %4 = vector.load %arg3[%c0_2, %c0_3] : memref<128x10xf32, #tpu.memory_space<vmem>>, vector<32x1xf32>
    %c0_4 = arith.constant 0 : index
    %c9 = arith.constant 9 : index
    %5 = vector.load %arg3[%c0_4, %c9] : memref<128x10xf32, #tpu.memory_space<vmem>>, vector<8x1xf32>
    %c0_5 = arith.constant 0 : index
    %c0_6 = arith.constant 0 : index
    %6 = vector.load %arg1[%c0_5, %c0_6] : memref<256x16xf32, #tpu.memory_space<vmem>>, vector<256x16xf32>
    %7 = tpu.transpose %6, [1, 0] : vector<256x16xf32> -> vector<16x256xf32>
    %8 = arith.truncf %7 : vector<16x256xf32> to vector<16x256xbf16>
    %cst = arith.constant dense<0.000000e+00> : vector<32x256xf32>
    %9 = tpu.matmul %1, %8, %cst {dimension_numbers = #tpu.dot_dimension_numbers<[1], [0], [0], [1], [0, 0, 1, 1], [], []>} : vector<32x16xbf16>, vector<16x256xbf16>, vector<32x256xf32> -> vector<32x256xf32>
    %10 = vector.broadcast %4 : vector<32x1xf32> to vector<32x256xf32>
    %11 = arith.addf %9, %10 : vector<32x256xf32>
    %c32 = arith.constant 32 : index
    %c0_7 = arith.constant 0 : index
    %12 = vector.load %arg2[%c32, %c0_7] : memref<360x128xf32, #tpu.memory_space<vmem>>, vector<128x32xf32>
    %13 = arith.truncf %12 : vector<128x32xf32> to vector<128x32xbf16>
    %c288 = arith.constant 288 : index
    %c0_8 = arith.constant 0 : index
    %14 = vector.load %arg2[%c288, %c0_8] : memref<360x128xf32, #tpu.memory_space<vmem>>, vector<32x128xf32>
    %15 = arith.truncf %14 : vector<32x128xf32> to vector<32x128xbf16>
    %c0_9 = arith.constant 0 : index
    %c5 = arith.constant 5 : index
    %16 = vector.load %arg3[%c0_9, %c5] : memref<128x10xf32, #tpu.memory_space<vmem>>, vector<128x1xf32>
    %c0_10 = arith.constant 0 : index
    %c7 = arith.constant 7 : index
    %17 = vector.load %arg3[%c0_10, %c7] : memref<128x10xf32, #tpu.memory_space<vmem>>, vector<32x1xf32>
    %c0_11 = arith.constant 0 : index
    %c1 = arith.constant 1 : index
    %18 = vector.load %arg3[%c0_11, %c1] : memref<128x10xf32, #tpu.memory_space<vmem>>, vector<32x1xf32>
    %c0_12 = arith.constant 0 : index
    %c3 = arith.constant 3 : index
    %19 = vector.load %arg3[%c0_12, %c3] : memref<128x10xf32, #tpu.memory_space<vmem>>, vector<32x1xf32>
    %cst_13 = arith.constant dense<0.000000e+00> : vector<256xf32>
    %20 = vector.multi_reduction <add>, %11, %cst_13 [0] : vector<32x256xf32> to vector<256xf32>
    %21 = vector.shape_cast %20 : vector<256xf32> to vector<1x256xf32>
    %cst_14 = arith.constant 3.200000e+01 : f32
    %22 = vector.broadcast %cst_14 : f32 to vector<1x256xf32>
    %23 = arith.divf %21, %22 : vector<1x256xf32>
    %24 = arith.mulf %11, %11 : vector<32x256xf32>
    %cst_15 = arith.constant dense<0.000000e+00> : vector<256xf32>
    %25 = vector.multi_reduction <add>, %24, %cst_15 [0] : vector<32x256xf32> to vector<256xf32>
    %26 = vector.shape_cast %25 : vector<256xf32> to vector<1x256xf32>
    %cst_16 = arith.constant 3.200000e+01 : f32
    %27 = vector.broadcast %cst_16 : f32 to vector<1x256xf32>
    %28 = arith.divf %26, %27 : vector<1x256xf32>
    %29 = arith.mulf %23, %23 : vector<1x256xf32>
    %30 = arith.subf %28, %29 : vector<1x256xf32>
    %cst_17 = arith.constant 0.000000e+00 : f32
    %31 = vector.broadcast %cst_17 : f32 to vector<1x256xf32>
    %32 = arith.maximumf %30, %31 : vector<1x256xf32>
    %33 = vector.broadcast %23 : vector<1x256xf32> to vector<32x256xf32>
    %34 = arith.subf %11, %33 : vector<32x256xf32>
    %cst_18 = arith.constant 9.99999997E-7 : f32
    %35 = vector.broadcast %cst_18 : f32 to vector<1x256xf32>
    %36 = arith.addf %32, %35 : vector<1x256xf32>
    %37 = math.rsqrt %36 : vector<1x256xf32>
    %38 = vector.broadcast %37 : vector<1x256xf32> to vector<32x256xf32>
    %39 = arith.mulf %34, %38 : vector<32x256xf32>
    %40 = vector.broadcast %18 : vector<32x1xf32> to vector<32x256xf32>
    %41 = arith.mulf %39, %40 : vector<32x256xf32>
    %42 = vector.broadcast %19 : vector<32x1xf32> to vector<32x256xf32>
    %43 = arith.addf %41, %42 : vector<32x256xf32>
    %44 = arith.truncf %43 : vector<32x256xf32> to vector<32x256xbf16>
    %cst_19 = arith.constant dense<0.000000e+00> : vector<128x256xf32>
    %45 = tpu.matmul %13, %44, %cst_19 {dimension_numbers = #tpu.dot_dimension_numbers<[1], [0], [0], [1], [0, 0, 1, 1], [], []>} : vector<128x32xbf16>, vector<32x256xbf16>, vector<128x256xf32> -> vector<128x256xf32>
    %46 = vector.broadcast %16 : vector<128x1xf32> to vector<128x256xf32>
    %47 = arith.addf %45, %46 : vector<128x256xf32>
    %48 = arith.negf %47 : vector<128x256xf32>
    %49 = math.exp %48 : vector<128x256xf32>
    %cst_20 = arith.constant 1.000000e+00 : f32
    %50 = vector.broadcast %cst_20 : f32 to vector<128x256xf32>
    %51 = arith.addf %50, %49 : vector<128x256xf32>
    %52 = arith.divf %50, %51 : vector<128x256xf32>
    %53 = arith.mulf %47, %52 : vector<128x256xf32>
    %54 = arith.truncf %53 : vector<128x256xf32> to vector<128x256xbf16>
    %cst_21 = arith.constant dense<0.000000e+00> : vector<32x256xf32>
    %55 = tpu.matmul %15, %54, %cst_21 {dimension_numbers = #tpu.dot_dimension_numbers<[1], [0], [0], [1], [0, 0, 1, 1], [], []>} : vector<32x128xbf16>, vector<128x256xbf16>, vector<32x256xf32> -> vector<32x256xf32>
    %56 = vector.broadcast %17 : vector<32x1xf32> to vector<32x256xf32>
    %57 = arith.addf %55, %56 : vector<32x256xf32>
    %58 = arith.addf %11, %57 : vector<32x256xf32>
    %c160 = arith.constant 160 : index
    %c0_22 = arith.constant 0 : index
    %59 = vector.load %arg2[%c160, %c0_22] : memref<360x128xf32, #tpu.memory_space<vmem>>, vector<128x32xf32>
    %60 = arith.truncf %59 : vector<128x32xf32> to vector<128x32xbf16>
    %c320 = arith.constant 320 : index
    %c0_23 = arith.constant 0 : index
    %61 = vector.load %arg2[%c320, %c0_23] : memref<360x128xf32, #tpu.memory_space<vmem>>, vector<32x128xf32>
    %62 = arith.truncf %61 : vector<32x128xf32> to vector<32x128xbf16>
    %c0_24 = arith.constant 0 : index
    %c6 = arith.constant 6 : index
    %63 = vector.load %arg3[%c0_24, %c6] : memref<128x10xf32, #tpu.memory_space<vmem>>, vector<128x1xf32>
    %c0_25 = arith.constant 0 : index
    %c8 = arith.constant 8 : index
    %64 = vector.load %arg3[%c0_25, %c8] : memref<128x10xf32, #tpu.memory_space<vmem>>, vector<32x1xf32>
    %c0_26 = arith.constant 0 : index
    %c2 = arith.constant 2 : index
    %65 = vector.load %arg3[%c0_26, %c2] : memref<128x10xf32, #tpu.memory_space<vmem>>, vector<32x1xf32>
    %c0_27 = arith.constant 0 : index
    %c4 = arith.constant 4 : index
    %66 = vector.load %arg3[%c0_27, %c4] : memref<128x10xf32, #tpu.memory_space<vmem>>, vector<32x1xf32>
    %cst_28 = arith.constant dense<0.000000e+00> : vector<256xf32>
    %67 = vector.multi_reduction <add>, %58, %cst_28 [0] : vector<32x256xf32> to vector<256xf32>
    %68 = vector.shape_cast %67 : vector<256xf32> to vector<1x256xf32>
    %cst_29 = arith.constant 3.200000e+01 : f32
    %69 = vector.broadcast %cst_29 : f32 to vector<1x256xf32>
    %70 = arith.divf %68, %69 : vector<1x256xf32>
    %71 = arith.mulf %58, %58 : vector<32x256xf32>
    %cst_30 = arith.constant dense<0.000000e+00> : vector<256xf32>
    %72 = vector.multi_reduction <add>, %71, %cst_30 [0] : vector<32x256xf32> to vector<256xf32>
    %73 = vector.shape_cast %72 : vector<256xf32> to vector<1x256xf32>
    %cst_31 = arith.constant 3.200000e+01 : f32
    %74 = vector.broadcast %cst_31 : f32 to vector<1x256xf32>
    %75 = arith.divf %73, %74 : vector<1x256xf32>
    %76 = arith.mulf %70, %70 : vector<1x256xf32>
    %77 = arith.subf %75, %76 : vector<1x256xf32>
    %cst_32 = arith.constant 0.000000e+00 : f32
    %78 = vector.broadcast %cst_32 : f32 to vector<1x256xf32>
    %79 = arith.maximumf %77, %78 : vector<1x256xf32>
    %80 = vector.broadcast %70 : vector<1x256xf32> to vector<32x256xf32>
    %81 = arith.subf %58, %80 : vector<32x256xf32>
    %cst_33 = arith.constant 9.99999997E-7 : f32
    %82 = vector.broadcast %cst_33 : f32 to vector<1x256xf32>
    %83 = arith.addf %79, %82 : vector<1x256xf32>
    %84 = math.rsqrt %83 : vector<1x256xf32>
    %85 = vector.broadcast %84 : vector<1x256xf32> to vector<32x256xf32>
    %86 = arith.mulf %81, %85 : vector<32x256xf32>
    %87 = vector.broadcast %65 : vector<32x1xf32> to vector<32x256xf32>
    %88 = arith.mulf %86, %87 : vector<32x256xf32>
    %89 = vector.broadcast %66 : vector<32x1xf32> to vector<32x256xf32>
    %90 = arith.addf %88, %89 : vector<32x256xf32>
    %91 = arith.truncf %90 : vector<32x256xf32> to vector<32x256xbf16>
    %cst_34 = arith.constant dense<0.000000e+00> : vector<128x256xf32>
    %92 = tpu.matmul %60, %91, %cst_34 {dimension_numbers = #tpu.dot_dimension_numbers<[1], [0], [0], [1], [0, 0, 1, 1], [], []>} : vector<128x32xbf16>, vector<32x256xbf16>, vector<128x256xf32> -> vector<128x256xf32>
    %93 = vector.broadcast %63 : vector<128x1xf32> to vector<128x256xf32>
    %94 = arith.addf %92, %93 : vector<128x256xf32>
    %95 = arith.negf %94 : vector<128x256xf32>
    %96 = math.exp %95 : vector<128x256xf32>
    %cst_35 = arith.constant 1.000000e+00 : f32
    %97 = vector.broadcast %cst_35 : f32 to vector<128x256xf32>
    %98 = arith.addf %97, %96 : vector<128x256xf32>
    %99 = arith.divf %97, %98 : vector<128x256xf32>
    %100 = arith.mulf %94, %99 : vector<128x256xf32>
    %101 = arith.truncf %100 : vector<128x256xf32> to vector<128x256xbf16>
    %cst_36 = arith.constant dense<0.000000e+00> : vector<32x256xf32>
    %102 = tpu.matmul %62, %101, %cst_36 {dimension_numbers = #tpu.dot_dimension_numbers<[1], [0], [0], [1], [0, 0, 1, 1], [], []>} : vector<32x128xbf16>, vector<128x256xbf16>, vector<32x256xf32> -> vector<32x256xf32>
    %103 = vector.broadcast %64 : vector<32x1xf32> to vector<32x256xf32>
    %104 = arith.addf %102, %103 : vector<32x256xf32>
    %105 = arith.addf %58, %104 : vector<32x256xf32>
    %106 = arith.negf %105 : vector<32x256xf32>
    %107 = math.exp %106 : vector<32x256xf32>
    %cst_37 = arith.constant 1.000000e+00 : f32
    %108 = vector.broadcast %cst_37 : f32 to vector<32x256xf32>
    %109 = arith.addf %108, %107 : vector<32x256xf32>
    %110 = arith.divf %108, %109 : vector<32x256xf32>
    %111 = arith.mulf %105, %110 : vector<32x256xf32>
    %112 = arith.truncf %111 : vector<32x256xf32> to vector<32x256xbf16>
    %cst_38 = arith.constant dense<0.000000e+00> : vector<8x256xf32>
    %113 = tpu.matmul %3, %112, %cst_38 {dimension_numbers = #tpu.dot_dimension_numbers<[1], [0], [0], [1], [0, 0, 1, 1], [], []>} : vector<8x32xbf16>, vector<32x256xbf16>, vector<8x256xf32> -> vector<8x256xf32>
    %114 = vector.broadcast %5 : vector<8x1xf32> to vector<8x256xf32>
    %115 = arith.addf %113, %114 : vector<8x256xf32>
    %116 = tpu.transpose %115, [1, 0] : vector<8x256xf32> -> vector<256x8xf32>
    %c0_39 = arith.constant 0 : index
    %c0_40 = arith.constant 0 : index
    %117 = vector.load %arg4[%c0_39, %c0_40] : memref<256x8xf32, #tpu.memory_space<vmem>>, vector<256x8xf32>
    tpu.vector_store %arg4[%c0_39, %c0_40], %116 {strides = array<i32>} : memref<256x8xf32, #tpu.memory_space<vmem>>, vector<256x8xf32>,
    return
  }
  func.func @transform_0(%arg0: i32) -> (i32, i32) {
    %c0_i32 = arith.constant 0 : i32
    %c0_i32_0 = arith.constant 0 : i32
    return %arg0, %c0_i32 : i32, i32
  }
  func.func @transform_1(%arg0: i32) -> (i32, i32) {
    %c0_i32 = arith.constant 0 : i32
    %c0_i32_0 = arith.constant 0 : i32
    %c0_i32_1 = arith.constant 0 : i32
    return %c0_i32, %c0_i32_0 : i32, i32
  }
  func.func @transform_2(%arg0: i32) -> (i32, i32) {
    %c0_i32 = arith.constant 0 : i32
    %c0_i32_0 = arith.constant 0 : i32
    %c0_i32_1 = arith.constant 0 : i32
    return %c0_i32, %c0_i32_0 : i32, i32
  }
  func.func @transform_3(%arg0: i32) -> (i32, i32) {
    %c0_i32 = arith.constant 0 : i32
    %c0_i32_0 = arith.constant 0 : i32
    return %arg0, %c0_i32 : i32, i32
  }
}

</mosaic_0001>

<llo_original>
// kernel: tpu_custom_call.1
$region0: #{tpu_custom_call.1}
  #allocation0 [shape = 'u32[]', space=smem, size = 0x4, offset = 0x4, fixed_abs, tag = 'smem constant byte address 0x4 - core index']
  #allocation1 [shape = 'u32[72,128]{1,0:T(1,128)}', space=vmem, size = 0x9000, scoped, tag = 'internal scratch']
  %s0 = inlined_call_operand.vmem [shape: f32[256,16], index: 0, kind: input, shape index: {}]
  %s1 = inlined_call_operand.vmem [shape: f32[360,128], index: 1, kind: input, shape index: {}]
  %s2 = inlined_call_operand.vmem [shape: f32[128,10], index: 2, kind: input, shape index: {}]
  %s3 = inlined_call_operand.vmem [shape: f32[256,8], index: 3, kind: output, shape index: {}]
  %s4 = sld [smem:[#allocation0]]
  $region22: #{tpu_custom_call.1} parent=0
    _
  %s6 = ssub.s32 1, %s4
  %s7 = scalar_select 0, %s6, %s4
  // Predicated region
  $region2: #{tpu_custom_call.1} parent=0 // pred_check
    _
  $region3: #{tpu_custom_call.1} parent=0 // pred_check_branch
    %9 = sbr.rel (0) target = $region5
  $region4: #{tpu_custom_call.1} parent=0 // pred_region
    _
  $region5: #{tpu_custom_call.1} parent=0 // pred_fallthru
    _
  // Predicated region
  $region6: #{tpu_custom_call.1} parent=0 // pred_check
    _
  $region7: #{tpu_custom_call.1} parent=0 // pred_check_branch
    %11 = sbr.rel (0) target = $region9
  $region8: #{tpu_custom_call.1} parent=0 // pred_region
    _
  $region9: #{tpu_custom_call.1} parent=0 // pred_fallthru
    _
  // Predicated region
  $region10: #{tpu_custom_call.1} parent=0 // pred_check
    _
  $region11: #{tpu_custom_call.1} parent=0 // pred_check_branch
    %13 = sbr.rel (0) target = $region13
  $region12: #{tpu_custom_call.1} parent=0 // pred_region
    _
  $region13: #{tpu_custom_call.1} parent=0 // pred_fallthru
    _
  %v15 = vld [vmem:[%s1] sm:$0xff]
  %v16 = vld [vmem:[%s1 + $0x8] sm:$0xff]
  %v17 = vld [vmem:[%s1 + $0x10] sm:$0xff]
  %v18 = vld [vmem:[%s1 + $0x18] sm:$0xff]
  %v19 = vpack.c.bf16 %v16, %v15
  %v20 = vpack.c.bf16 %v18, %v17
  %v21 = vld [vmem:[%s1 + $0x160] sm:$0xff]
  %v22 = vpack.c.bf16 %v21, %v21
  %v23 = vld [vmem:[%s2] sm:$0xff]
  %v24 = vld [vmem:[%s2 + $0x8] sm:$0xff]
  %v25 = vld [vmem:[%s2 + $0x10] sm:$0xff]
  %v26 = vld [vmem:[%s2 + $0x18] sm:$0xff]
  %v27 = vld [vmem:[%s0] sm:$0xff]
  %v28 = vld [vmem:[%s0 + $0x8] sm:$0xff]
  %v29 = vld [vmem:[%s0 + $0x10] sm:$0xff]
  %v30 = vld [vmem:[%s0 + $0x18] sm:$0xff]
  %v31 = vld [vmem:[%s0 + $0x20] sm:$0xff]
  %v32 = vld [vmem:[%s0 + $0x28] sm:$0xff]
  %v33 = vld [vmem:[%s0 + $0x30] sm:$0xff]
  %v34 = vld [vmem:[%s0 + $0x38] sm:$0xff]
  %v35 = vld [vmem:[%s0 + $0x40] sm:$0xff]
  %v36 = vld [vmem:[%s0 + $0x48] sm:$0xff]
  %v37 = vld [vmem:[%s0 + $0x50] sm:$0xff]
  %v38 = vld [vmem:[%s0 + $0x58] sm:$0xff]
  %v39 = vld [vmem:[%s0 + $0x60] sm:$0xff]
  %v40 = vld [vmem:[%s0 + $0x68] sm:$0xff]
  %v41 = vld [vmem:[%s0 + $0x70] sm:$0xff]
  %v42 = vld [vmem:[%s0 + $0x78] sm:$0xff]
  %v43 = vld [vmem:[%s0 + $0x80] sm:$0xff]
  %v44 = vld [vmem:[%s0 + $0x88] sm:$0xff]
  %v45 = vld [vmem:[%s0 + $0x90] sm:$0xff]
  %v46 = vld [vmem:[%s0 + $0x98] sm:$0xff]
  %v47 = vld [vmem:[%s0 + $0xa0] sm:$0xff]
  %v48 = vld [vmem:[%s0 + $0xa8] sm:$0xff]
  %v49 = vld [vmem:[%s0 + $0xb0] sm:$0xff]
  %v50 = vld [vmem:[%s0 + $0xb8] sm:$0xff]
  %v51 = vld [vmem:[%s0 + $0xc0] sm:$0xff]
  %v52 = vld [vmem:[%s0 + $0xc8] sm:$0xff]
  %v53 = vld [vmem:[%s0 + $0xd0] sm:$0xff]
  %v54 = vld [vmem:[%s0 + $0xd8] sm:$0xff]
  %v55 = vld [vmem:[%s0 + $0xe0] sm:$0xff]
  %v56 = vld [vmem:[%s0 + $0xe8] sm:$0xff]
  %v57 = vld [vmem:[%s0 + $0xf0] sm:$0xff]
  %v58 = vld [vmem:[%s0 + $0xf8] sm:$0xff]
  %59 = vxpose.xlu0.b32.start [1/16] %v27, 128
  %60 = vxpose.xlu0.b32.cont [2/16] %v28, 128
  %61 = vxpose.xlu0.b32.cont [3/16] %v29, 128
  %62 = vxpose.xlu0.b32.cont [4/16] %v30, 128
  %63 = vxpose.xlu0.b32.cont [5/16] %v31, 128
  %64 = vxpose.xlu0.b32.cont [6/16] %v32, 128
  %65 = vxpose.xlu0.b32.cont [7/16] %v33, 128
  %66 = vxpose.xlu0.b32.cont [8/16] %v34, 128
  %67 = vxpose.xlu0.b32.cont [9/16] %v35, 128
  %68 = vxpose.xlu0.b32.cont [10/16] %v36, 128
  %69 = vxpose.xlu0.b32.cont [11/16] %v37, 128
  %70 = vxpose.xlu0.b32.cont [12/16] %v38, 128
  %71 = vxpose.xlu0.b32.cont [13/16] %v39, 128
  %72 = vxpose.xlu0.b32.cont [14/16] %v40, 128
  %73 = vxpose.xlu0.b32.cont [15/16] %v41, 128
  %74 = vxpose.xlu0.b32.end [16/16] %v42, 128
  %v75 = vpop.trf.xlu0
  %v76 = vpop.trf.xlu0
  %v77 = vpop.trf.xlu0
  %v78 = vpop.trf.xlu0
  %v79 = vpop.trf.xlu0
  %v80 = vpop.trf.xlu0
  %v81 = vpop.trf.xlu0
  %v82 = vpop.trf.xlu0
  %v83 = vpop.trf.xlu0
  %v84 = vpop.trf.xlu0
  %v85 = vpop.trf.xlu0
  %v86 = vpop.trf.xlu0
  %v87 = vpop.trf.xlu0
  %v88 = vpop.trf.xlu0
  %v89 = vpop.trf.xlu0
  %v90 = vpop.trf.xlu0
  %91 = vxpose.xlu0.b32.start [1/16] %v43, 128
  %92 = vxpose.xlu0.b32.cont [2/16] %v44, 128
  %93 = vxpose.xlu0.b32.cont [3/16] %v45, 128
  %94 = vxpose.xlu0.b32.cont [4/16] %v46, 128
  %95 = vxpose.xlu0.b32.cont [5/16] %v47, 128
  %96 = vxpose.xlu0.b32.cont [6/16] %v48, 128
  %97 = vxpose.xlu0.b32.cont [7/16] %v49, 128
  %98 = vxpose.xlu0.b32.cont [8/16] %v50, 128
  %99 = vxpose.xlu0.b32.cont [9/16] %v51, 128
  %100 = vxpose.xlu0.b32.cont [10/16] %v52, 128
  %101 = vxpose.xlu0.b32.cont [11/16] %v53, 128
  %102 = vxpose.xlu0.b32.cont [12/16] %v54, 128
  %103 = vxpose.xlu0.b32.cont [13/16] %v55, 128
  %104 = vxpose.xlu0.b32.cont [14/16] %v56, 128
  %105 = vxpose.xlu0.b32.cont [15/16] %v57, 128
  %106 = vxpose.xlu0.b32.end [16/16] %v58, 128
  %v107 = vpop.trf.xlu0
  %v108 = vpop.trf.xlu0
  %v109 = vpop.trf.xlu0
  %v110 = vpop.trf.xlu0
  %v111 = vpop.trf.xlu0
  %v112 = vpop.trf.xlu0
  %v113 = vpop.trf.xlu0
  %v114 = vpop.trf.xlu0
  %v115 = vpop.trf.xlu0
  %v116 = vpop.trf.xlu0
  %v117 = vpop.trf.xlu0
  %v118 = vpop.trf.xlu0
  %v119 = vpop.trf.xlu0
  %v120 = vpop.trf.xlu0
  %v121 = vpop.trf.xlu0
  %v122 = vpop.trf.xlu0
  %v123 = vpack.c.bf16 %v76, %v75
  %v124 = vpack.c.bf16 %v108, %v107
  %126 = vset.pattern.permute.xlu0 0
  %127 = vperm.xlu0 %126, %v23
  %v128 = vpop.permute.xlu0 %127
  %131 = vset.pattern.permute.xlu0 0
  %132 = vperm.xlu0 %131, %v24
  %v133 = vpop.permute.xlu0 %132
  %136 = vset.pattern.permute.xlu0 0
  %137 = vperm.xlu0 %136, %v25
  %v138 = vpop.permute.xlu0 %137
  %141 = vset.pattern.permute.xlu0 0
  %142 = vperm.xlu0 %141, %v26
  %v143 = vpop.permute.xlu0 %142
  %vm145 = vcmask 130048
  %v147 = vsel %vm145, %v19, 0
  %v150 = vsel %vm145, %v20, 0
  %152 = vmatpush.bf16.msra.mxu0 0
  %153 = vmatpush.bf16.msra.mxu0 0
  %154 = vmatpush.bf16.msra.mxu0 0
  %155 = vmatpush.bf16.msra.mxu0 0
  %156 = vmatpush.bf16.msra.mxu0 0
  %157 = vmatpush.bf16.msra.mxu0 0
  %158 = vmatpush.bf16.msra.mxu0 0
  %159 = vmatpush.bf16.msra.mxu0 %v123
  %160 = vmatmul.bf16.gmra.mxu0 %v147
  %v161 = vpop.f32.mrf.mxu0
  %v162 = vadd.f32 %v128, %v161
  %v163 = vpop.f32.mrf.mxu0
  %v164 = vadd.f32 %v133, %v163
  %165 = vmatmul.bf16.gmra.mxu0 %v150
  %v166 = vpop.f32.mrf.mxu0
  %v167 = vadd.f32 %v138, %v166
  %v168 = vpop.f32.mrf.mxu0
  %v169 = vadd.f32 %v143, %v168
  %170 = vdwg.mxu0
  %171 = vmatpush.bf16.msra.mxu0 0
  %172 = vmatpush.bf16.msra.mxu0 0
  %173 = vmatpush.bf16.msra.mxu0 0
  %174 = vmatpush.bf16.msra.mxu0 0
  %175 = vmatpush.bf16.msra.mxu0 0
  %176 = vmatpush.bf16.msra.mxu0 0
  %177 = vmatpush.bf16.msra.mxu0 0
  %178 = vmatpush.bf16.msra.mxu0 %v124
  %179 = vmatmul.bf16.gmra.mxu0 %v147
  %v180 = vpop.f32.mrf.mxu0
  %v181 = vadd.f32 %v128, %v180
  %v182 = vpop.f32.mrf.mxu0
  %v183 = vadd.f32 %v133, %v182
  %184 = vmatmul.bf16.gmra.mxu0 %v150
  %v185 = vpop.f32.mrf.mxu0
  %v186 = vadd.f32 %v138, %v185
  %v187 = vpop.f32.mrf.mxu0
  %v188 = vadd.f32 %v143, %v187
  %189 = vdwg.mxu0
  %v190 = vld [vmem:[%s1 + $0x20] sm:$0xff]
  %v191 = vld [vmem:[%s1 + $0x28] sm:$0xff]
  %v192 = vld [vmem:[%s1 + $0x30] sm:$0xff]
  %v193 = vld [vmem:[%s1 + $0x38] sm:$0xff]
  %v194 = vld [vmem:[%s1 + $0x40] sm:$0xff]
  %v195 = vld [vmem:[%s1 + $0x48] sm:$0xff]
  %v196 = vld [vmem:[%s1 + $0x50] sm:$0xff]
  %v197 = vld [vmem:[%s1 + $0x58] sm:$0xff]
  %v198 = vld [vmem:[%s1 + $0x60] sm:$0xff]
  %v199 = vld [vmem:[%s1 + $0x68] sm:$0xff]
  %v200 = vld [vmem:[%s1 + $0x70] sm:$0xff]
  %v201 = vld [vmem:[%s1 + $0x78] sm:$0xff]
  %v202 = vld [vmem:[%s1 + $0x80] sm:$0xff]
  %v203 = vld [vmem:[%s1 + $0x88] sm:$0xff]
  %v204 = vld [vmem:[%s1 + $0x90] sm:$0xff]
  %v205 = vld [vmem:[%s1 + $0x98] sm:$0xff]
  %v206 = vpack.c.bf16 %v191, %v190
  %v207 = vpack.c.bf16 %v193, %v192
  %v208 = vpack.c.bf16 %v195, %v194
  %v209 = vpack.c.bf16 %v197, %v196
  %v210 = vpack.c.bf16 %v199, %v198
  %v211 = vpack.c.bf16 %v201, %v200
  %v212 = vpack.c.bf16 %v203, %v202
  %v213 = vpack.c.bf16 %v205, %v204
  %v214 = vld [vmem:[%s1 + $0x120] sm:$0xff]
  %v215 = vld [vmem:[%s1 + $0x128] sm:$0xff]
  %v216 = vld [vmem:[%s1 + $0x130] sm:$0xff]
  %v217 = vld [vmem:[%s1 + $0x138] sm:$0xff]
  %v218 = vpack.c.bf16 %v215, %v214
  %v219 = vpack.c.bf16 %v217, %v216
  %v220 = vld [vmem:[%s2] sm:$0xff]
  %v221 = vld [vmem:[%s2 + $0x8] sm:$0xff]
  %v222 = vld [vmem:[%s2 + $0x10] sm:$0xff]
  %v223 = vld [vmem:[%s2 + $0x18] sm:$0xff]
  %v224 = vld [vmem:[%s2 + $0x20] sm:$0xff]
  %v225 = vld [vmem:[%s2 + $0x28] sm:$0xff]
  %v226 = vld [vmem:[%s2 + $0x30] sm:$0xff]
  %v227 = vld [vmem:[%s2 + $0x38] sm:$0xff]
  %v228 = vld [vmem:[%s2 + $0x40] sm:$0xff]
  %v229 = vld [vmem:[%s2 + $0x48] sm:$0xff]
  %v230 = vld [vmem:[%s2 + $0x50] sm:$0xff]
  %v231 = vld [vmem:[%s2 + $0x58] sm:$0xff]
  %v232 = vld [vmem:[%s2 + $0x60] sm:$0xff]
  %v233 = vld [vmem:[%s2 + $0x68] sm:$0xff]
  %v234 = vld [vmem:[%s2 + $0x70] sm:$0xff]
  %v235 = vld [vmem:[%s2 + $0x78] sm:$0xff]
  %v236 = vadd.f32 %v162, %v164
  %v237 = vadd.f32 %v236, %v167
  %v238 = vadd.f32 %v237, %v169
  %v239 = vrot.slane %v238, 4
  %v240 = vadd.f32 %v238, %v239
  %v241 = vrot.slane %v240, 2
  %v242 = vadd.f32 %v240, %v241
  %v243 = vrot.slane %v242, 1
  %v244 = vadd.f32 %v242, %v243
  %v245 = vadd.f32 %v181, %v183
  %v246 = vadd.f32 %v245, %v186
  %v247 = vadd.f32 %v246, %v188
  %v248 = vrot.slane %v247, 4
  %v249 = vadd.f32 %v247, %v248
  %v250 = vrot.slane %v249, 2
  %v251 = vadd.f32 %v249, %v250
  %v252 = vrot.slane %v251, 1
  %v253 = vadd.f32 %v251, %v252
  %v254 = vrcp.pop 32.0
  %v255 = vmul.f32 32.0, %v254
  %v256 = vsub.f32 1.0, %v255
  %v257 = vmul.f32 %v254, %v256
  %v258 = vadd.f32 %v254, %v257
  %vm259 = vweird.f32 %v254
  %v260 = vsel %vm259, %v254, %v258
  %v261 = vmul.f32 %v244, %v260
  %v262 = vmul.f32 %v253, %v260
  %v263 = vmul.f32 %v162, %v162
  %v264 = vmul.f32 %v181, %v181
  %v265 = vmul.f32 %v164, %v164
  %v266 = vmul.f32 %v183, %v183
  %v267 = vmul.f32 %v167, %v167
  %v268 = vmul.f32 %v186, %v186
  %v269 = vmul.f32 %v169, %v169
  %v270 = vmul.f32 %v188, %v188
  %v271 = vadd.f32 %v263, %v265
  %v272 = vadd.f32 %v271, %v267
  %v273 = vadd.f32 %v272, %v269
  %v274 = vrot.slane %v273, 4
  %v275 = vadd.f32 %v273, %v274
  %v276 = vrot.slane %v275, 2
  %v277 = vadd.f32 %v275, %v276
  %v278 = vrot.slane %v277, 1
  %v279 = vadd.f32 %v277, %v278
  %v280 = vadd.f32 %v264, %v266
  %v281 = vadd.f32 %v280, %v268
  %v282 = vadd.f32 %v281, %v270
  %v283 = vrot.slane %v282, 4
  %v284 = vadd.f32 %v282, %v283
  %v285 = vrot.slane %v284, 2
  %v286 = vadd.f32 %v284, %v285
  %v287 = vrot.slane %v286, 1
  %v288 = vadd.f32 %v286, %v287
  %v289 = vmul.f32 %v279, %v260
  %v290 = vmul.f32 %v288, %v260
  %v291 = vmul.f32 %v261, %v261
  %v292 = vmul.f32 %v262, %v262
  %v293 = vsub.f32 %v289, %v291
  %v294 = vsub.f32 %v290, %v292
  %v295 = vmax.f32 %v293, 0.0
  %v296 = vmax.f32 %v294, 0.0
  %v297 = vsub.f32 %v162, %v261
  %v298 = vsub.f32 %v181, %v262
  %v299 = vsub.f32 %v164, %v261
  %v300 = vsub.f32 %v183, %v262
  %v301 = vsub.f32 %v167, %v261
  %v302 = vsub.f32 %v186, %v262
  %v303 = vsub.f32 %v169, %v261
  %v304 = vsub.f32 %v188, %v262
  %v305 = vadd.f32 %v295, 1e-06
  %v306 = vadd.f32 %v296, 1e-06
  %v307 = vrsqrt.pop %v305
  %v308 = vmul.f32 %v307, %v305
  %v309 = vmul.f32 %v308, %v307
  %v310 = vmul.f32 0.5, %v309
  %v311 = vsub.f32 1.5, %v310
  %v312 = vmul.f32 %v307, %v311
  %vm313 = vweird.f32 %v305
  %vm314 = vweird.f32 %v307
  %vm315 = vmor %vm313, %vm314
  %v316 = vsel %vm315, %v307, %v312
  %v317 = vrsqrt.pop %v306
  %v318 = vmul.f32 %v317, %v306
  %v319 = vmul.f32 %v318, %v317
  %v320 = vmul.f32 0.5, %v319
  %v321 = vsub.f32 1.5, %v320
  %v322 = vmul.f32 %v317, %v321
  %vm323 = vweird.f32 %v306
  %vm324 = vweird.f32 %v317
  %vm325 = vmor %vm323, %vm324
  %v326 = vsel %vm325, %v317, %v322
  %v327 = vmul.f32 %v297, %v316
  %v328 = vmul.f32 %v298, %v326
  %v329 = vmul.f32 %v299, %v316
  %v330 = vmul.f32 %v300, %v326
  %v331 = vmul.f32 %v301, %v316
  %v332 = vmul.f32 %v302, %v326
  %v333 = vmul.f32 %v303, %v316
  %v334 = vmul.f32 %v304, %v326
  %335 = vset.pattern.permute.xlu0 1
  %336 = vperm.xlu0 %335, %v23
  %v337 = vpop.permute.xlu0 %336
  %339 = vset.pattern.permute.xlu0 1
  %340 = vperm.xlu0 %339, %v24
  %v341 = vpop.permute.xlu0 %340
  %343 = vset.pattern.permute.xlu0 1
  %344 = vperm.xlu0 %343, %v25
  %v345 = vpop.permute.xlu0 %344
  %347 = vset.pattern.permute.xlu0 1
  %348 = vperm.xlu0 %347, %v26
  %v349 = vpop.permute.xlu0 %348
  %v351 = vmul.f32 %v327, %v337
  %v352 = vmul.f32 %v328, %v337
  %v353 = vmul.f32 %v329, %v341
  %v354 = vmul.f32 %v330, %v341
  %v355 = vmul.f32 %v331, %v345
  %v356 = vmul.f32 %v332, %v345
  %v357 = vmul.f32 %v333, %v349
  %v358 = vmul.f32 %v334, %v349
  %359 = vset.pattern.permute.xlu0 3
  %360 = vperm.xlu0 %359, %v23
  %v361 = vpop.permute.xlu0 %360
  %363 = vset.pattern.permute.xlu0 3
  %364 = vperm.xlu0 %363, %v24
  %v365 = vpop.permute.xlu0 %364
  %367 = vset.pattern.permute.xlu0 3
  %368 = vperm.xlu0 %367, %v25
  %v369 = vpop.permute.xlu0 %368
  %371 = vset.pattern.permute.xlu0 3
  %372 = vperm.xlu0 %371, %v26
  %v373 = vpop.permute.xlu0 %372
  %v375 = vadd.f32 %v351, %v361
  %v376 = vadd.f32 %v352, %v361
  %v377 = vadd.f32 %v353, %v365
  %v378 = vadd.f32 %v354, %v365
  %v379 = vadd.f32 %v355, %v369
  %v380 = vadd.f32 %v356, %v369
  %v381 = vadd.f32 %v357, %v373
  %v382 = vadd.f32 %v358, %v373
  %v383 = vpack.c.bf16 %v377, %v375
  %v384 = vpack.c.bf16 %v378, %v376
  %v385 = vpack.c.bf16 %v381, %v379
  %v386 = vpack.c.bf16 %v382, %v380
  %388 = vset.pattern.permute.xlu0 5
  %389 = vperm.xlu0 %388, %v220
  %v390 = vpop.permute.xlu0 %389
  %393 = vset.pattern.permute.xlu0 5
  %394 = vperm.xlu0 %393, %v221
  %v395 = vpop.permute.xlu0 %394
  %398 = vset.pattern.permute.xlu0 5
  %399 = vperm.xlu0 %398, %v222
  %v400 = vpop.permute.xlu0 %399
  %403 = vset.pattern.permute.xlu0 5
  %404 = vperm.xlu0 %403, %v223
  %v405 = vpop.permute.xlu0 %404
  %408 = vset.pattern.permute.xlu0 5
  %409 = vperm.xlu0 %408, %v224
  %v410 = vpop.permute.xlu0 %409
  %413 = vset.pattern.permute.xlu0 5
  %414 = vperm.xlu0 %413, %v225
  %v415 = vpop.permute.xlu0 %414
  %418 = vset.pattern.permute.xlu0 5
  %419 = vperm.xlu0 %418, %v226
  %v420 = vpop.permute.xlu0 %419
  %423 = vset.pattern.permute.xlu0 5
  %424 = vperm.xlu0 %423, %v227
  %v425 = vpop.permute.xlu0 %424
  %428 = vset.pattern.permute.xlu0 5
  %429 = vperm.xlu0 %428, %v228
  %v430 = vpop.permute.xlu0 %429
  %433 = vset.pattern.permute.xlu0 5
  %434 = vperm.xlu0 %433, %v229
  %v435 = vpop.permute.xlu0 %434
  %438 = vset.pattern.permute.xlu0 5
  %439 = vperm.xlu0 %438, %v230
  %v440 = vpop.permute.xlu0 %439
  %443 = vset.pattern.permute.xlu0 5
  %444 = vperm.xlu0 %443, %v231
  %v445 = vpop.permute.xlu0 %444
  %448 = vset.pattern.permute.xlu0 5
  %449 = vperm.xlu0 %448, %v232
  %v450 = vpop.permute.xlu0 %449
  %453 = vset.pattern.permute.xlu0 5
  %454 = vperm.xlu0 %453, %v233
  %v455 = vpop.permute.xlu0 %454
  %458 = vset.pattern.permute.xlu0 5
  %459 = vperm.xlu0 %458, %v234
  %v460 = vpop.permute.xlu0 %459
  %463 = vset.pattern.permute.xlu0 5
  %464 = vperm.xlu0 %463, %v235
  %v465 = vpop.permute.xlu0 %464
  %vm467 = vcmask 261120
  %v469 = vsel %vm467, %v206, 0
  %v472 = vsel %vm467, %v207, 0
  %v475 = vsel %vm467, %v208, 0
  %v478 = vsel %vm467, %v209, 0
  %v481 = vsel %vm467, %v210, 0
  %v484 = vsel %vm467, %v211, 0
  %v487 = vsel %vm467, %v212, 0
  %v490 = vsel %vm467, %v213, 0
  %492 = vmatpush.bf16.msra.mxu0 0
  %493 = vmatpush.bf16.msra.mxu0 0
  %494 = vmatpush.bf16.msra.mxu0 0
  %495 = vmatpush.bf16.msra.mxu0 0
  %496 = vmatpush.bf16.msra.mxu0 0
  %497 = vmatpush.bf16.msra.mxu0 0
  %498 = vmatpush.bf16.msra.mxu0 %v385
  %499 = vmatpush.bf16.msra.mxu0 %v383
  %500 = vmatmul.bf16.gmra.mxu0 %v469
  %v501 = vpop.f32.mrf.mxu0
  %v502 = vadd.f32 %v390, %v501
  %v503 = vpop.f32.mrf.mxu0
  %v504 = vadd.f32 %v395, %v503
  %505 = vmatmul.bf16.gmra.mxu0 %v472
  %v506 = vpop.f32.mrf.mxu0
  %v507 = vadd.f32 %v400, %v506
  %v508 = vpop.f32.mrf.mxu0
  %v509 = vadd.f32 %v405, %v508
  %510 = vmatmul.bf16.gmra.mxu0 %v475
  %v511 = vpop.f32.mrf.mxu0
  %v512 = vadd.f32 %v410, %v511
  %v513 = vpop.f32.mrf.mxu0
  %v514 = vadd.f32 %v415, %v513
  %515 = vmatmul.bf16.gmra.mxu0 %v478
  %v516 = vpop.f32.mrf.mxu0
  %v517 = vadd.f32 %v420, %v516
  %v518 = vpop.f32.mrf.mxu0
  %v519 = vadd.f32 %v425, %v518
  %520 = vmatmul.bf16.gmra.mxu0 %v481
  %v521 = vpop.f32.mrf.mxu0
  %v522 = vadd.f32 %v430, %v521
  %v523 = vpop.f32.mrf.mxu0
  %v524 = vadd.f32 %v435, %v523
  %525 = vmatmul.bf16.gmra.mxu0 %v484
  %v526 = vpop.f32.mrf.mxu0
  %v527 = vadd.f32 %v440, %v526
  %v528 = vpop.f32.mrf.mxu0
  %v529 = vadd.f32 %v445, %v528
  %530 = vmatmul.bf16.gmra.mxu0 %v487
  %v531 = vpop.f32.mrf.mxu0
  %v532 = vadd.f32 %v450, %v531
  %v533 = vpop.f32.mrf.mxu0
  %v534 = vadd.f32 %v455, %v533
  %535 = vmatmul.bf16.gmra.mxu0 %v490
  %v536 = vpop.f32.mrf.mxu0
  %v537 = vadd.f32 %v460, %v536
  %v538 = vpop.f32.mrf.mxu0
  %v539 = vadd.f32 %v465, %v538
  %540 = vdwg.mxu0
  %541 = vmatpush.bf16.msra.mxu0 0
  %542 = vmatpush.bf16.msra.mxu0 0
  %543 = vmatpush.bf16.msra.mxu0 0
  %544 = vmatpush.bf16.msra.mxu0 0
  %545 = vmatpush.bf16.msra.mxu0 0
  %546 = vmatpush.bf16.msra.mxu0 0
  %547 = vmatpush.bf16.msra.mxu0 %v386
  %548 = vmatpush.bf16.msra.mxu0 %v384
  %549 = vmatmul.bf16.gmra.mxu0 %v469
  %v550 = vpop.f32.mrf.mxu0
  %v551 = vadd.f32 %v390, %v550
  %v552 = vpop.f32.mrf.mxu0
  %v553 = vadd.f32 %v395, %v552
  %554 = vmatmul.bf16.gmra.mxu0 %v472
  %v555 = vpop.f32.mrf.mxu0
  %v556 = vadd.f32 %v400, %v555
  %v557 = vpop.f32.mrf.mxu0
  %v558 = vadd.f32 %v405, %v557
  %559 = vmatmul.bf16.gmra.mxu0 %v475
  %v560 = vpop.f32.mrf.mxu0
  %v561 = vadd.f32 %v410, %v560
  %v562 = vpop.f32.mrf.mxu0
  %v563 = vadd.f32 %v415, %v562
  %564 = vmatmul.bf16.gmra.mxu0 %v478
  %v565 = vpop.f32.mrf.mxu0
  %v566 = vadd.f32 %v420, %v565
  %v567 = vpop.f32.mrf.mxu0
  %v568 = vadd.f32 %v425, %v567
  %569 = vmatmul.bf16.gmra.mxu0 %v481
  %v570 = vpop.f32.mrf.mxu0
  %v571 = vadd.f32 %v430, %v570
  %v572 = vpop.f32.mrf.mxu0
  %v573 = vadd.f32 %v435, %v572
  %574 = vmatmul.bf16.gmra.mxu0 %v484
  %v575 = vpop.f32.mrf.mxu0
  %v576 = vadd.f32 %v440, %v575
  %v577 = vpop.f32.mrf.mxu0
  %v578 = vadd.f32 %v445, %v577
  %579 = vmatmul.bf16.gmra.mxu0 %v487
  %v580 = vpop.f32.mrf.mxu0
  %v581 = vadd.f32 %v450, %v580
  %v582 = vpop.f32.mrf.mxu0
  %v583 = vadd.f32 %v455, %v582
  %584 = vmatmul.bf16.gmra.mxu0 %v490
  %v585 = vpop.f32.mrf.mxu0
  %v586 = vadd.f32 %v460, %v585
  %v587 = vpop.f32.mrf.mxu0
  %v588 = vadd.f32 %v465, %v587
  %589 = vdwg.mxu0
  %v590 = vxor.u32 %v502, 2147483648
  %v591 = vxor.u32 %v551, 2147483648
  %v592 = vxor.u32 %v504, 2147483648
  %v593 = vxor.u32 %v553, 2147483648
  %v594 = vxor.u32 %v507, 2147483648
  %v595 = vxor.u32 %v556, 2147483648
  %v596 = vxor.u32 %v509, 2147483648
  %v597 = vxor.u32 %v558, 2147483648
  %v598 = vxor.u32 %v512, 2147483648
  %v599 = vxor.u32 %v561, 2147483648
  %v600 = vxor.u32 %v514, 2147483648
  %v601 = vxor.u32 %v563, 2147483648
  %v602 = vxor.u32 %v517, 2147483648
  %v603 = vxor.u32 %v566, 2147483648
  %v604 = vxor.u32 %v519, 2147483648
  %v605 = vxor.u32 %v568, 2147483648
  %v606 = vxor.u32 %v522, 2147483648
  %v607 = vxor.u32 %v571, 2147483648
  %v608 = vxor.u32 %v524, 2147483648
  %v609 = vxor.u32 %v573, 2147483648
  %v610 = vxor.u32 %v527, 2147483648
  %v611 = vxor.u32 %v576, 2147483648
  %v612 = vxor.u32 %v529, 2147483648
  %v613 = vxor.u32 %v578, 2147483648
  %v614 = vxor.u32 %v532, 2147483648
  %v615 = vxor.u32 %v581, 2147483648
  %v616 = vxor.u32 %v534, 2147483648
  %v617 = vxor.u32 %v583, 2147483648
  %v618 = vxor.u32 %v537, 2147483648
  %v619 = vxor.u32 %v586, 2147483648
  %v620 = vxor.u32 %v539, 2147483648
  %v621 = vxor.u32 %v588, 2147483648
  %v622 = vmul.f32 %v590, 1.442695
  %v623 = vpow.pop %v622
  %v624 = vmul.f32 %v591, 1.442695
  %v625 = vpow.pop %v624
  %v626 = vmul.f32 %v592, 1.442695
  %v627 = vpow.pop %v626
  %v628 = vmul.f32 %v593, 1.442695
  %v629 = vpow.pop %v628
  %v630 = vmul.f32 %v594, 1.442695
  %v631 = vpow.pop %v630
  %v632 = vmul.f32 %v595, 1.442695
  %v633 = vpow.pop %v632
  %v634 = vmul.f32 %v596, 1.442695
  %v635 = vpow.pop %v634
  %v636 = vmul.f32 %v597, 1.442695
  %v637 = vpow.pop %v636
  %v638 = vmul.f32 %v598, 1.442695
  %v639 = vpow.pop %v638
  %v640 = vmul.f32 %v599, 1.442695
  %v641 = vpow.pop %v640
  %v642 = vmul.f32 %v600, 1.442695
  %v643 = vpow.pop %v642
  %v644 = vmul.f32 %v601, 1.442695
  %v645 = vpow.pop %v644
  %v646 = vmul.f32 %v602, 1.442695
  %v647 = vpow.pop %v646
  %v648 = vmul.f32 %v603, 1.442695
  %v649 = vpow.pop %v648
  %v650 = vmul.f32 %v604, 1.442695
  %v651 = vpow.pop %v650
  %v652 = vmul.f32 %v605, 1.442695
  %v653 = vpow.pop %v652
  %v654 = vmul.f32 %v606, 1.442695
  %v655 = vpow.pop %v654
  %v656 = vmul.f32 %v607, 1.442695
  %v657 = vpow.pop %v656
  %v658 = vmul.f32 %v608, 1.442695
  %v659 = vpow.pop %v658
  %v660 = vmul.f32 %v609, 1.442695
  %v661 = vpow.pop %v660
  %v662 = vmul.f32 %v610, 1.442695
  %v663 = vpow.pop %v662
  %v664 = vmul.f32 %v611, 1.442695
  %v665 = vpow.pop %v664
  %v666 = vmul.f32 %v612, 1.442695
  %v667 = vpow.pop %v666
  %v668 = vmul.f32 %v613, 1.442695
  %v669 = vpow.pop %v668
  %v670 = vmul.f32 %v614, 1.442695
  %v671 = vpow.pop %v670
  %v672 = vmul.f32 %v615, 1.442695
  %v673 = vpow.pop %v672
  %v674 = vmul.f32 %v616, 1.442695
  %v675 = vpow.pop %v674
  %v676 = vmul.f32 %v617, 1.442695
  %v677 = vpow.pop %v676
  %v678 = vmul.f32 %v618, 1.442695
  %v679 = vpow.pop %v678
  %v680 = vmul.f32 %v619, 1.442695
  %v681 = vpow.pop %v680
  %v682 = vmul.f32 %v620, 1.442695
  %v683 = vpow.pop %v682
  %v684 = vmul.f32 %v621, 1.442695
  %v685 = vpow.pop %v684
  %v686 = vadd.f32 %v623, 1.0
  %v687 = vadd.f32 %v625, 1.0
  %v688 = vadd.f32 %v627, 1.0
  %v689 = vadd.f32 %v629, 1.0
  %v690 = vadd.f32 %v631, 1.0
  %v691 = vadd.f32 %v633, 1.0
  %v692 = vadd.f32 %v635, 1.0
  %v693 = vadd.f32 %v637, 1.0
  %v694 = vadd.f32 %v639, 1.0
  %v695 = vadd.f32 %v641, 1.0
  %v696 = vadd.f32 %v643, 1.0
  %v697 = vadd.f32 %v645, 1.0
  %v698 = vadd.f32 %v647, 1.0
  %v699 = vadd.f32 %v649, 1.0
  %v700 = vadd.f32 %v651, 1.0
  %v701 = vadd.f32 %v653, 1.0
  %v702 = vadd.f32 %v655, 1.0
  %v703 = vadd.f32 %v657, 1.0
  %v704 = vadd.f32 %v659, 1.0
  %v705 = vadd.f32 %v661, 1.0
  %v706 = vadd.f32 %v663, 1.0
  %v707 = vadd.f32 %v665, 1.0
  %v708 = vadd.f32 %v667, 1.0
  %v709 = vadd.f32 %v669, 1.0
  %v710 = vadd.f32 %v671, 1.0
  %v711 = vadd.f32 %v673, 1.0
  %v712 = vadd.f32 %v675, 1.0
  %v713 = vadd.f32 %v677, 1.0
  %v714 = vadd.f32 %v679, 1.0
  %v715 = vadd.f32 %v681, 1.0
  %v716 = vadd.f32 %v683, 1.0
  %v717 = vadd.f32 %v685, 1.0
  %v718 = vrcp.pop %v686
  %v719 = vmul.f32 %v686, %v718
  %v720 = vsub.f32 1.0, %v719
  %v721 = vmul.f32 %v718, %v720
  %v722 = vadd.f32 %v718, %v721
  %vm723 = vweird.f32 %v686
  %vm724 = vweird.f32 %v718
  %vm725 = vmor %vm723, %vm724
  %v726 = vsel %vm725, %v718, %v722
  %v727 = vand.u32 2147483647, %v686
  %vm728 = vcmp.eq.f32.partialorder %v727, 8.507059e+37
  %v729 = vand.u32 %v686, 2147483648
  %v730 = vor.u32 1.1754944e-38, %v729
  %v731 = vsel %vm728, %v730, %v726
  %v732 = vmul.f32 1.0, %v731
  %v733 = vrcp.pop %v687
  %v734 = vmul.f32 %v687, %v733
  %v735 = vsub.f32 1.0, %v734
  %v736 = vmul.f32 %v733, %v735
  %v737 = vadd.f32 %v733, %v736
  %vm738 = vweird.f32 %v687
  %vm739 = vweird.f32 %v733
  %vm740 = vmor %vm738, %vm739
  %v741 = vsel %vm740, %v733, %v737
  %v742 = vand.u32 2147483647, %v687
  %vm743 = vcmp.eq.f32.partialorder %v742, 8.507059e+37
  %v744 = vand.u32 %v687, 2147483648
  %v745 = vor.u32 1.1754944e-38, %v744
  %v746 = vsel %vm743, %v745, %v741
  %v747 = vmul.f32 1.0, %v746
  %v748 = vrcp.pop %v688
  %v749 = vmul.f32 %v688, %v748
  %v750 = vsub.f32 1.0, %v749
  %v751 = vmul.f32 %v748, %v750
  %v752 = vadd.f32 %v748, %v751
  %vm753 = vweird.f32 %v688
  %vm754 = vweird.f32 %v748
  %vm755 = vmor %vm753, %vm754
  %v756 = vsel %vm755, %v748, %v752
  %v757 = vand.u32 2147483647, %v688
  %vm758 = vcmp.eq.f32.partialorder %v757, 8.507059e+37
  %v759 = vand.u32 %v688, 2147483648
  %v760 = vor.u32 1.1754944e-38, %v759
  %v761 = vsel %vm758, %v760, %v756
  %v762 = vmul.f32 1.0, %v761
  %v763 = vrcp.pop %v689
  %v764 = vmul.f32 %v689, %v763
  %v765 = vsub.f32 1.0, %v764
  %v766 = vmul.f32 %v763, %v765
  %v767 = vadd.f32 %v763, %v766
  %vm768 = vweird.f32 %v689
  %vm769 = vweird.f32 %v763
  %vm770 = vmor %vm768, %vm769
  %v771 = vsel %vm770, %v763, %v767
  %v772 = vand.u32 2147483647, %v689
  %vm773 = vcmp.eq.f32.partialorder %v772, 8.507059e+37
  %v774 = vand.u32 %v689, 2147483648
  %v775 = vor.u32 1.1754944e-38, %v774
  %v776 = vsel %vm773, %v775, %v771
  %v777 = vmul.f32 1.0, %v776
  %v778 = vrcp.pop %v690
  %v779 = vmul.f32 %v690, %v778
  %v780 = vsub.f32 1.0, %v779
  %v781 = vmul.f32 %v778, %v780
  %v782 = vadd.f32 %v778, %v781
  %vm783 = vweird.f32 %v690
  %vm784 = vweird.f32 %v778
  %vm785 = vmor %vm783, %vm784
  %v786 = vsel %vm785, %v778, %v782
  %v787 = vand.u32 2147483647, %v690
  %vm788 = vcmp.eq.f32.partialorder %v787, 8.507059e+37
  %v789 = vand.u32 %v690, 2147483648
  %v790 = vor.u32 1.1754944e-38, %v789
  %v791 = vsel %vm788, %v790, %v786
  %v792 = vmul.f32 1.0, %v791
  %v793 = vrcp.pop %v691
  %v794 = vmul.f32 %v691, %v793
  %v795 = vsub.f32 1.0, %v794
  %v796 = vmul.f32 %v793, %v795
  %v797 = vadd.f32 %v793, %v796
  %vm798 = vweird.f32 %v691
  %vm799 = vweird.f32 %v793
  %vm800 = vmor %vm798, %vm799
  %v801 = vsel %vm800, %v793, %v797
  %v802 = vand.u32 2147483647, %v691
  %vm803 = vcmp.eq.f32.partialorder %v802, 8.507059e+37
  %v804 = vand.u32 %v691, 2147483648
  %v805 = vor.u32 1.1754944e-38, %v804
  %v806 = vsel %vm803, %v805, %v801
  %v807 = vmul.f32 1.0, %v806
  %v808 = vrcp.pop %v692
  %v809 = vmul.f32 %v692, %v808
  %v810 = vsub.f32 1.0, %v809
  %v811 = vmul.f32 %v808, %v810
  %v812 = vadd.f32 %v808, %v811
  %vm813 = vweird.f32 %v692
  %vm814 = vweird.f32 %v808
  %vm815 = vmor %vm813, %vm814
  %v816 = vsel %vm815, %v808, %v812
  %v817 = vand.u32 2147483647, %v692
  %vm818 = vcmp.eq.f32.partialorder %v817, 8.507059e+37
  %v819 = vand.u32 %v692, 2147483648
  %v820 = vor.u32 1.1754944e-38, %v819
  %v821 = vsel %vm818, %v820, %v816
  %v822 = vmul.f32 1.0, %v821
  %v823 = vrcp.pop %v693
  %v824 = vmul.f32 %v693, %v823
  %v825 = vsub.f32 1.0, %v824
  %v826 = vmul.f32 %v823, %v825
  %v827 = vadd.f32 %v823, %v826
  %vm828 = vweird.f32 %v693
  %vm829 = vweird.f32 %v823
  %vm830 = vmor %vm828, %vm829
  %v831 = vsel %vm830, %v823, %v827
  %v832 = vand.u32 2147483647, %v693
  %vm833 = vcmp.eq.f32.partialorder %v832, 8.507059e+37
  %v834 = vand.u32 %v693, 2147483648
  %v835 = vor.u32 1.1754944e-38, %v834
  %v836 = vsel %vm833, %v835, %v831
  %v837 = vmul.f32 1.0, %v836
  %v838 = vrcp.pop %v694
  %v839 = vmul.f32 %v694, %v838
  %v840 = vsub.f32 1.0, %v839
  %v841 = vmul.f32 %v838, %v840
  %v842 = vadd.f32 %v838, %v841
  %vm843 = vweird.f32 %v694
  %vm844 = vweird.f32 %v838
  %vm845 = vmor %vm843, %vm844
  %v846 = vsel %vm845, %v838, %v842
  %v847 = vand.u32 2147483647, %v694
  %vm848 = vcmp.eq.f32.partialorder %v847, 8.507059e+37
  %v849 = vand.u32 %v694, 2147483648
  %v850 = vor.u32 1.1754944e-38, %v849
  %v851 = vsel %vm848, %v850, %v846
  %v852 = vmul.f32 1.0, %v851
  %v853 = vrcp.pop %v695
  %v854 = vmul.f32 %v695, %v853
  %v855 = vsub.f32 1.0, %v854
  %v856 = vmul.f32 %v853, %v855
  %v857 = vadd.f32 %v853, %v856
  %vm858 = vweird.f32 %v695
  %vm859 = vweird.f32 %v853
  %vm860 = vmor %vm858, %vm859
  %v861 = vsel %vm860, %v853, %v857
  %v862 = vand.u32 2147483647, %v695
  %vm863 = vcmp.eq.f32.partialorder %v862, 8.507059e+37
  %v864 = vand.u32 %v695, 2147483648
  %v865 = vor.u32 1.1754944e-38, %v864
  %v866 = vsel %vm863, %v865, %v861
  %v867 = vmul.f32 1.0, %v866
  %v868 = vrcp.pop %v696
  %v869 = vmul.f32 %v696, %v868
  %v870 = vsub.f32 1.0, %v869
  %v871 = vmul.f32 %v868, %v870
  %v872 = vadd.f32 %v868, %v871
  %vm873 = vweird.f32 %v696
  %vm874 = vweird.f32 %v868
  %vm875 = vmor %vm873, %vm874
  %v876 = vsel %vm875, %v868, %v872
  %v877 = vand.u32 2147483647, %v696
  %vm878 = vcmp.eq.f32.partialorder %v877, 8.507059e+37
  %v879 = vand.u32 %v696, 2147483648
  %v880 = vor.u32 1.1754944e-38, %v879
  %v881 = vsel %vm878, %v880, %v876
  %v882 = vmul.f32 1.0, %v881
  %v883 = vrcp.pop %v697
  %v884 = vmul.f32 %v697, %v883
  %v885 = vsub.f32 1.0, %v884
  %v886 = vmul.f32 %v883, %v885
  %v887 = vadd.f32 %v883, %v886
  %vm888 = vweird.f32 %v697
  %vm889 = vweird.f32 %v883
  %vm890 = vmor %vm888, %vm889
  %v891 = vsel %vm890, %v883, %v887
  %v892 = vand.u32 2147483647, %v697
  %vm893 = vcmp.eq.f32.partialorder %v892, 8.507059e+37
  %v894 = vand.u32 %v697, 2147483648
  %v895 = vor.u32 1.1754944e-38, %v894
  %v896 = vsel %vm893, %v895, %v891
  %v897 = vmul.f32 1.0, %v896
  %v898 = vrcp.pop %v698
  %v899 = vmul.f32 %v698, %v898
  %v900 = vsub.f32 1.0, %v899
  %v901 = vmul.f32 %v898, %v900
  %v902 = vadd.f32 %v898, %v901
  %vm903 = vweird.f32 %v698
  %vm904 = vweird.f32 %v898
  %vm905 = vmor %vm903, %vm904
  %v906 = vsel %vm905, %v898, %v902
  %v907 = vand.u32 2147483647, %v698
  %vm908 = vcmp.eq.f32.partialorder %v907, 8.507059e+37
  %v909 = vand.u32 %v698, 2147483648
  %v910 = vor.u32 1.1754944e-38, %v909
  %v911 = vsel %vm908, %v910, %v906
  %v912 = vmul.f32 1.0, %v911
  %v913 = vrcp.pop %v699
  %v914 = vmul.f32 %v699, %v913
  %v915 = vsub.f32 1.0, %v914
  %v916 = vmul.f32 %v913, %v915
  %v917 = vadd.f32 %v913, %v916
  %vm918 = vweird.f32 %v699
  %vm919 = vweird.f32 %v913
  %vm920 = vmor %vm918, %vm919
  %v921 = vsel %vm920, %v913, %v917
  %v922 = vand.u32 2147483647, %v699
  %vm923 = vcmp.eq.f32.partialorder %v922, 8.507059e+37
  %v924 = vand.u32 %v699, 2147483648
  %v925 = vor.u32 1.1754944e-38, %v924
  %v926 = vsel %vm923, %v925, %v921
  %v927 = vmul.f32 1.0, %v926
  %v928 = vrcp.pop %v700
  %v929 = vmul.f32 %v700, %v928
  %v930 = vsub.f32 1.0, %v929
  %v931 = vmul.f32 %v928, %v930
  %v932 = vadd.f32 %v928, %v931
  %vm933 = vweird.f32 %v700
  %vm934 = vweird.f32 %v928
  %vm935 = vmor %vm933, %vm934
  %v936 = vsel %vm935, %v928, %v932
  %v937 = vand.u32 2147483647, %v700
  %vm938 = vcmp.eq.f32.partialorder %v937, 8.507059e+37
  %v939 = vand.u32 %v700, 2147483648
  %v940 = vor.u32 1.1754944e-38, %v939
  %v941 = vsel %vm938, %v940, %v936
  %v942 = vmul.f32 1.0, %v941
  %v943 = vrcp.pop %v701
  %v944 = vmul.f32 %v701, %v943
  %v945 = vsub.f32 1.0, %v944
  %v946 = vmul.f32 %v943, %v945
  %v947 = vadd.f32 %v943, %v946
  %vm948 = vweird.f32 %v701
  %vm949 = vweird.f32 %v943
  %vm950 = vmor %vm948, %vm949
  %v951 = vsel %vm950, %v943, %v947
  %v952 = vand.u32 2147483647, %v701
  %vm953 = vcmp.eq.f32.partialorder %v952, 8.507059e+37
  %v954 = vand.u32 %v701, 2147483648
  %v955 = vor.u32 1.1754944e-38, %v954
  %v956 = vsel %vm953, %v955, %v951
  %v957 = vmul.f32 1.0, %v956
  %v958 = vrcp.pop %v702
  %v959 = vmul.f32 %v702, %v958
  %v960 = vsub.f32 1.0, %v959
  %v961 = vmul.f32 %v958, %v960
  %v962 = vadd.f32 %v958, %v961
  %vm963 = vweird.f32 %v702
  %vm964 = vweird.f32 %v958
  %vm965 = vmor %vm963, %vm964
  %v966 = vsel %vm965, %v958, %v962
  %v967 = vand.u32 2147483647, %v702
  %vm968 = vcmp.eq.f32.partialorder %v967, 8.507059e+37
  %v969 = vand.u32 %v702, 2147483648
  %v970 = vor.u32 1.1754944e-38, %v969
  %v971 = vsel %vm968, %v970, %v966
  %v972 = vmul.f32 1.0, %v971
  %v973 = vrcp.pop %v703
  %v974 = vmul.f32 %v703, %v973
  %v975 = vsub.f32 1.0, %v974
  %v976 = vmul.f32 %v973, %v975
  %v977 = vadd.f32 %v973, %v976
  %vm978 = vweird.f32 %v703
  %vm979 = vweird.f32 %v973
  %vm980 = vmor %vm978, %vm979
  %v981 = vsel %vm980, %v973, %v977
  %v982 = vand.u32 2147483647, %v703
  %vm983 = vcmp.eq.f32.partialorder %v982, 8.507059e+37
  %v984 = vand.u32 %v703, 2147483648
  %v985 = vor.u32 1.1754944e-38, %v984
  %v986 = vsel %vm983, %v985, %v981
  %v987 = vmul.f32 1.0, %v986
  %v988 = vrcp.pop %v704
  %v989 = vmul.f32 %v704, %v988
  %v990 = vsub.f32 1.0, %v989
  %v991 = vmul.f32 %v988, %v990
  %v992 = vadd.f32 %v988, %v991
  %vm993 = vweird.f32 %v704
  %vm994 = vweird.f32 %v988
  %vm995 = vmor %vm993, %vm994
  %v996 = vsel %vm995, %v988, %v992
  %v997 = vand.u32 2147483647, %v704
  %vm998 = vcmp.eq.f32.partialorder %v997, 8.507059e+37
  %v999 = vand.u32 %v704, 2147483648
  %v1000 = vor.u32 1.1754944e-38, %v999
  %v1001 = vsel %vm998, %v1000, %v996
  %v1002 = vmul.f32 1.0, %v1001
  %v1003 = vrcp.pop %v705
  %v1004 = vmul.f32 %v705, %v1003
  %v1005 = vsub.f32 1.0, %v1004
  %v1006 = vmul.f32 %v1003, %v1005
  %v1007 = vadd.f32 %v1003, %v1006
  %vm1008 = vweird.f32 %v705
  %vm1009 = vweird.f32 %v1003
  %vm1010 = vmor %vm1008, %vm1009
  %v1011 = vsel %vm1010, %v1003, %v1007
  %v1012 = vand.u32 2147483647, %v705
  %vm1013 = vcmp.eq.f32.partialorder %v1012, 8.507059e+37
  %v1014 = vand.u32 %v705, 2147483648
  %v1015 = vor.u32 1.1754944e-38, %v1014
  %v1016 = vsel %vm1013, %v1015, %v1011
  %v1017 = vmul.f32 1.0, %v1016
  %v1018 = vrcp.pop %v706
  %v1019 = vmul.f32 %v706, %v1018
  %v1020 = vsub.f32 1.0, %v1019
  %v1021 = vmul.f32 %v1018, %v1020
  %v1022 = vadd.f32 %v1018, %v1021
  %vm1023 = vweird.f32 %v706
  %vm1024 = vweird.f32 %v1018
  %vm1025 = vmor %vm1023, %vm1024
  %v1026 = vsel %vm1025, %v1018, %v1022
  %v1027 = vand.u32 2147483647, %v706
  %vm1028 = vcmp.eq.f32.partialorder %v1027, 8.507059e+37
  %v1029 = vand.u32 %v706, 2147483648
  %v1030 = vor.u32 1.1754944e-38, %v1029
  %v1031 = vsel %vm1028, %v1030, %v1026
  %v1032 = vmul.f32 1.0, %v1031
  %v1033 = vrcp.pop %v707
  %v1034 = vmul.f32 %v707, %v1033
  %v1035 = vsub.f32 1.0, %v1034
  %v1036 = vmul.f32 %v1033, %v1035
  %v1037 = vadd.f32 %v1033, %v1036
  %vm1038 = vweird.f32 %v707
  %vm1039 = vweird.f32 %v1033
  %vm1040 = vmor %vm1038, %vm1039
  %v1041 = vsel %vm1040, %v1033, %v1037
  %v1042 = vand.u32 2147483647, %v707
  %vm1043 = vcmp.eq.f32.partialorder %v1042, 8.507059e+37
  %v1044 = vand.u32 %v707, 2147483648
  %v1045 = vor.u32 1.1754944e-38, %v1044
  %v1046 = vsel %vm1043, %v1045, %v1041
  %v1047 = vmul.f32 1.0, %v1046
  %v1048 = vrcp.pop %v708
  %v1049 = vmul.f32 %v708, %v1048
  %v1050 = vsub.f32 1.0, %v1049
  %v1051 = vmul.f32 %v1048, %v1050
  %v1052 = vadd.f32 %v1048, %v1051
  %vm1053 = vweird.f32 %v708
  %vm1054 = vweird.f32 %v1048
  %vm1055 = vmor %vm1053, %vm1054
  %v1056 = vsel %vm1055, %v1048, %v1052
  %v1057 = vand.u32 2147483647, %v708
  %vm1058 = vcmp.eq.f32.partialorder %v1057, 8.507059e+37
  %v1059 = vand.u32 %v708, 2147483648
  %v1060 = vor.u32 1.1754944e-38, %v1059
  %v1061 = vsel %vm1058, %v1060, %v1056
  %v1062 = vmul.f32 1.0, %v1061
  %v1063 = vrcp.pop %v709
  %v1064 = vmul.f32 %v709, %v1063
  %v1065 = vsub.f32 1.0, %v1064
  %v1066 = vmul.f32 %v1063, %v1065
  %v1067 = vadd.f32 %v1063, %v1066
  %vm1068 = vweird.f32 %v709
  %vm1069 = vweird.f32 %v1063
  %vm1070 = vmor %vm1068, %vm1069
  %v1071 = vsel %vm1070, %v1063, %v1067
  %v1072 = vand.u32 2147483647, %v709
  %vm1073 = vcmp.eq.f32.partialorder %v1072, 8.507059e+37
  %v1074 = vand.u32 %v709, 2147483648
  %v1075 = vor.u32 1.1754944e-38, %v1074
  %v1076 = vsel %vm1073, %v1075, %v1071
  %v1077 = vmul.f32 1.0, %v1076
  %v1078 = vrcp.pop %v710
  %v1079 = vmul.f32 %v710, %v1078
  %v1080 = vsub.f32 1.0, %v1079
  %v1081 = vmul.f32 %v1078, %v1080
  %v1082 = vadd.f32 %v1078, %v1081
  %vm1083 = vweird.f32 %v710
  %vm1084 = vweird.f32 %v1078
  %vm1085 = vmor %vm1083, %vm1084
  %v1086 = vsel %vm1085, %v1078, %v1082
  %v1087 = vand.u32 2147483647, %v710
  %vm1088 = vcmp.eq.f32.partialorder %v1087, 8.507059e+37
  %v1089 = vand.u32 %v710, 2147483648
  %v1090 = vor.u32 1.1754944e-38, %v1089
  %v1091 = vsel %vm1088, %v1090, %v1086
  %v1092 = vmul.f32 1.0, %v1091
  %v1093 = vrcp.pop %v711
  %v1094 = vmul.f32 %v711, %v1093
  %v1095 = vsub.f32 1.0, %v1094
  %v1096 = vmul.f32 %v1093, %v1095
  %v1097 = vadd.f32 %v1093, %v1096
  %vm1098 = vweird.f32 %v711
  %vm1099 = vweird.f32 %v1093
  %vm1100 = vmor %vm1098, %vm1099
  %v1101 = vsel %vm1100, %v1093, %v1097
  %v1102 = vand.u32 2147483647, %v711
  %vm1103 = vcmp.eq.f32.partialorder %v1102, 8.507059e+37
  %v1104 = vand.u32 %v711, 2147483648
  %v1105 = vor.u32 1.1754944e-38, %v1104
  %v1106 = vsel %vm1103, %v1105, %v1101
  %v1107 = vmul.f32 1.0, %v1106
  %v1108 = vrcp.pop %v712
  %v1109 = vmul.f32 %v712, %v1108
  %v1110 = vsub.f32 1.0, %v1109
  %v1111 = vmul.f32 %v1108, %v1110
  %v1112 = vadd.f32 %v1108, %v1111
  %vm1113 = vweird.f32 %v712
  %vm1114 = vweird.f32 %v1108
  %vm1115 = vmor %vm1113, %vm1114
  %v1116 = vsel %vm1115, %v1108, %v1112
  %v1117 = vand.u32 2147483647, %v712
  %vm1118 = vcmp.eq.f32.partialorder %v1117, 8.507059e+37
  %v1119 = vand.u32 %v712, 2147483648
  %v1120 = vor.u32 1.1754944e-38, %v1119
  %v1121 = vsel %vm1118, %v1120, %v1116
  %v1122 = vmul.f32 1.0, %v1121
  %v1123 = vrcp.pop %v713
  %v1124 = vmul.f32 %v713, %v1123
  %v1125 = vsub.f32 1.0, %v1124
  %v1126 = vmul.f32 %v1123, %v1125
  %v1127 = vadd.f32 %v1123, %v1126
  %vm1128 = vweird.f32 %v713
  %vm1129 = vweird.f32 %v1123
  %vm1130 = vmor %vm1128, %vm1129
  %v1131 = vsel %vm1130, %v1123, %v1127
  %v1132 = vand.u32 2147483647, %v713
  %vm1133 = vcmp.eq.f32.partialorder %v1132, 8.507059e+37
  %v1134 = vand.u32 %v713, 2147483648
  %v1135 = vor.u32 1.1754944e-38, %v1134
  %v1136 = vsel %vm1133, %v1135, %v1131
  %v1137 = vmul.f32 1.0, %v1136
  %v1138 = vrcp.pop %v714
  %v1139 = vmul.f32 %v714, %v1138
  %v1140 = vsub.f32 1.0, %v1139
  %v1141 = vmul.f32 %v1138, %v1140
  %v1142 = vadd.f32 %v1138, %v1141
  %vm1143 = vweird.f32 %v714
  %vm1144 = vweird.f32 %v1138
  %vm1145 = vmor %vm1143, %vm1144
  %v1146 = vsel %vm1145, %v1138, %v1142
  %v1147 = vand.u32 2147483647, %v714
  %vm1148 = vcmp.eq.f32.partialorder %v1147, 8.507059e+37
  %v1149 = vand.u32 %v714, 2147483648
  %v1150 = vor.u32 1.1754944e-38, %v1149
  %v1151 = vsel %vm1148, %v1150, %v1146
  %v1152 = vmul.f32 1.0, %v1151
  %v1153 = vrcp.pop %v715
  %v1154 = vmul.f32 %v715, %v1153
  %v1155 = vsub.f32 1.0, %v1154
  %v1156 = vmul.f32 %v1153, %v1155
  %v1157 = vadd.f32 %v1153, %v1156
  %vm1158 = vweird.f32 %v715
  %vm1159 = vweird.f32 %v1153
  %vm1160 = vmor %vm1158, %vm1159
  %v1161 = vsel %vm1160, %v1153, %v1157
  %v1162 = vand.u32 2147483647, %v715
  %vm1163 = vcmp.eq.f32.partialorder %v1162, 8.507059e+37
  %v1164 = vand.u32 %v715, 2147483648
  %v1165 = vor.u32 1.1754944e-38, %v1164
  %v1166 = vsel %vm1163, %v1165, %v1161
  %v1167 = vmul.f32 1.0, %v1166
  %v1168 = vrcp.pop %v716
  %v1169 = vmul.f32 %v716, %v1168
  %v1170 = vsub.f32 1.0, %v1169
  %v1171 = vmul.f32 %v1168, %v1170
  %v1172 = vadd.f32 %v1168, %v1171
  %vm1173 = vweird.f32 %v716
  %vm1174 = vweird.f32 %v1168
  %vm1175 = vmor %vm1173, %vm1174
  %v1176 = vsel %vm1175, %v1168, %v1172
  %v1177 = vand.u32 2147483647, %v716
  %vm1178 = vcmp.eq.f32.partialorder %v1177, 8.507059e+37
  %v1179 = vand.u32 %v716, 2147483648
  %v1180 = vor.u32 1.1754944e-38, %v1179
  %v1181 = vsel %vm1178, %v1180, %v1176
  %v1182 = vmul.f32 1.0, %v1181
  %v1183 = vrcp.pop %v717
  %v1184 = vmul.f32 %v717, %v1183
  %v1185 = vsub.f32 1.0, %v1184
  %v1186 = vmul.f32 %v1183, %v1185
  %v1187 = vadd.f32 %v1183, %v1186
  %vm1188 = vweird.f32 %v717
  %vm1189 = vweird.f32 %v1183
  %vm1190 = vmor %vm1188, %vm1189
  %v1191 = vsel %vm1190, %v1183, %v1187
  %v1192 = vand.u32 2147483647, %v717
  %vm1193 = vcmp.eq.f32.partialorder %v1192, 8.507059e+37
  %v1194 = vand.u32 %v717, 2147483648
  %v1195 = vor.u32 1.1754944e-38, %v1194
  %v1196 = vsel %vm1193, %v1195, %v1191
  %v1197 = vmul.f32 1.0, %v1196
  %v1198 = vmul.f32 %v502, %v732
  %v1199 = vmul.f32 %v551, %v747
  %v1200 = vmul.f32 %v504, %v762
  %v1201 = vmul.f32 %v553, %v777
  %v1202 = vmul.f32 %v507, %v792
  %v1203 = vmul.f32 %v556, %v807
  %v1204 = vmul.f32 %v509, %v822
  %v1205 = vmul.f32 %v558, %v837
  %v1206 = vmul.f32 %v512, %v852
  %v1207 = vmul.f32 %v561, %v867
  %v1208 = vmul.f32 %v514, %v882
  %v1209 = vmul.f32 %v563, %v897
  %v1210 = vmul.f32 %v517, %v912
  %v1211 = vmul.f32 %v566, %v927
  %v1212 = vmul.f32 %v519, %v942
  %v1213 = vmul.f32 %v568, %v957
  %v1214 = vmul.f32 %v522, %v972
  %v1215 = vmul.f32 %v571, %v987
  %v1216 = vmul.f32 %v524, %v1002
  %v1217 = vmul.f32 %v573, %v1017
  %v1218 = vmul.f32 %v527, %v1032
  %v1219 = vmul.f32 %v576, %v1047
  %v1220 = vmul.f32 %v529, %v1062
  %v1221 = vmul.f32 %v578, %v1077
  %v1222 = vmul.f32 %v532, %v1092
  %v1223 = vmul.f32 %v581, %v1107
  %v1224 = vmul.f32 %v534, %v1122
  %v1225 = vmul.f32 %v583, %v1137
  %v1226 = vmul.f32 %v537, %v1152
  %v1227 = vmul.f32 %v586, %v1167
  %v1228 = vmul.f32 %v539, %v1182
  %v1229 = vmul.f32 %v588, %v1197
  %v1230 = vpack.c.bf16 %v1200, %v1198
  %v1231 = vpack.c.bf16 %v1201, %v1199
  %v1232 = vpack.c.bf16 %v1204, %v1202
  %v1233 = vpack.c.bf16 %v1205, %v1203
  %v1234 = vpack.c.bf16 %v1208, %v1206
  %v1235 = vpack.c.bf16 %v1209, %v1207
  %v1236 = vpack.c.bf16 %v1212, %v1210
  %v1237 = vpack.c.bf16 %v1213, %v1211
  %v1238 = vpack.c.bf16 %v1216, %v1214
  %v1239 = vpack.c.bf16 %v1217, %v1215
  %v1240 = vpack.c.bf16 %v1220, %v1218
  %v1241 = vpack.c.bf16 %v1221, %v1219
  %v1242 = vpack.c.bf16 %v1224, %v1222
  %v1243 = vpack.c.bf16 %v1225, %v1223
  %v1244 = vpack.c.bf16 %v1228, %v1226
  %v1245 = vpack.c.bf16 %v1229, %v1227
  %1246 = vset.pattern.permute.xlu0 7
  %1247 = vperm.xlu0 %1246, %v23
  %v1248 = vpop.permute.xlu0 %1247
  %1250 = vset.pattern.permute.xlu0 7
  %1251 = vperm.xlu0 %1250, %v24
  %v1252 = vpop.permute.xlu0 %1251
  %1254 = vset.pattern.permute.xlu0 7
  %1255 = vperm.xlu0 %1254, %v25
  %v1256 = vpop.permute.xlu0 %1255
  %1258 = vset.pattern.permute.xlu0 7
  %1259 = vperm.xlu0 %1258, %v26
  %v1260 = vpop.permute.xlu0 %1259
  %1262 = vmatpush.bf16.msra.mxu0 %v1244
  %1263 = vmatpush.bf16.msra.mxu0 %v1242
  %1264 = vmatpush.bf16.msra.mxu0 %v1240
  %1265 = vmatpush.bf16.msra.mxu0 %v1238
  %1266 = vmatpush.bf16.msra.mxu0 %v1236
  %1267 = vmatpush.bf16.msra.mxu0 %v1234
  %1268 = vmatpush.bf16.msra.mxu0 %v1232
  %1269 = vmatpush.bf16.msra.mxu0 %v1230
  %1270 = vmatmul.bf16.gmra.mxu0 %v218
  %v1271 = vpop.f32.mrf.mxu0
  %v1272 = vadd.f32 %v1248, %v1271
  %v1273 = vpop.f32.mrf.mxu0
  %v1274 = vadd.f32 %v1252, %v1273
  %1275 = vmatmul.bf16.gmra.mxu0 %v219
  %v1276 = vpop.f32.mrf.mxu0
  %v1277 = vadd.f32 %v1256, %v1276
  %v1278 = vpop.f32.mrf.mxu0
  %v1279 = vadd.f32 %v1260, %v1278
  %1280 = vdwg.mxu0
  %1281 = vmatpush.bf16.msra.mxu0 %v1245
  %1282 = vmatpush.bf16.msra.mxu0 %v1243
  %1283 = vmatpush.bf16.msra.mxu0 %v1241
  %1284 = vmatpush.bf16.msra.mxu0 %v1239
  %1285 = vmatpush.bf16.msra.mxu0 %v1237
  %1286 = vmatpush.bf16.msra.mxu0 %v1235
  %1287 = vmatpush.bf16.msra.mxu0 %v1233
  %1288 = vmatpush.bf16.msra.mxu0 %v1231
  %1289 = vmatmul.bf16.gmra.mxu0 %v218
  %v1290 = vpop.f32.mrf.mxu0
  %v1291 = vadd.f32 %v1248, %v1290
  %v1292 = vpop.f32.mrf.mxu0
  %v1293 = vadd.f32 %v1252, %v1292
  %1294 = vmatmul.bf16.gmra.mxu0 %v219
  %v1295 = vpop.f32.mrf.mxu0
  %v1296 = vadd.f32 %v1256, %v1295
  %v1297 = vpop.f32.mrf.mxu0
  %v1298 = vadd.f32 %v1260, %v1297
  %1299 = vdwg.mxu0
  %v1300 = vadd.f32 %v162, %v1272
  %v1301 = vadd.f32 %v181, %v1291
  %v1302 = vadd.f32 %v164, %v1274
  %v1303 = vadd.f32 %v183, %v1293
  %v1304 = vadd.f32 %v167, %v1277
  %v1305 = vadd.f32 %v186, %v1296
  %v1306 = vadd.f32 %v169, %v1279
  %v1307 = vadd.f32 %v188, %v1298
  %v1308 = vld [vmem:[%s1 + $0xa0] sm:$0xff]
  %v1309 = vld [vmem:[%s1 + $0xa8] sm:$0xff]
  %v1310 = vld [vmem:[%s1 + $0xb0] sm:$0xff]
  %v1311 = vld [vmem:[%s1 + $0xb8] sm:$0xff]
  %v1312 = vld [vmem:[%s1 + $0xc0] sm:$0xff]
  %v1313 = vld [vmem:[%s1 + $0xc8] sm:$0xff]
  %v1314 = vld [vmem:[%s1 + $0xd0] sm:$0xff]
  %v1315 = vld [vmem:[%s1 + $0xd8] sm:$0xff]
  %v1316 = vld [vmem:[%s1 + $0xe0] sm:$0xff]
  %v1317 = vld [vmem:[%s1 + $0xe8] sm:$0xff]
  %v1318 = vld [vmem:[%s1 + $0xf0] sm:$0xff]
  %v1319 = vld [vmem:[%s1 + $0xf8] sm:$0xff]
  %v1320 = vld [vmem:[%s1 + $0x100] sm:$0xff]
  %v1321 = vld [vmem:[%s1 + $0x108] sm:$0xff]
  %v1322 = vld [vmem:[%s1 + $0x110] sm:$0xff]
  %v1323 = vld [vmem:[%s1 + $0x118] sm:$0xff]
  %v1324 = vpack.c.bf16 %v1309, %v1308
  %v1325 = vpack.c.bf16 %v1311, %v1310
  %v1326 = vpack.c.bf16 %v1313, %v1312
  %v1327 = vpack.c.bf16 %v1315, %v1314
  %v1328 = vpack.c.bf16 %v1317, %v1316
  %v1329 = vpack.c.bf16 %v1319, %v1318
  %v1330 = vpack.c.bf16 %v1321, %v1320
  %v1331 = vpack.c.bf16 %v1323, %v1322
  %v1332 = vld [vmem:[%s1 + $0x140] sm:$0xff]
  %v1333 = vld [vmem:[%s1 + $0x148] sm:$0xff]
  %v1334 = vld [vmem:[%s1 + $0x150] sm:$0xff]
  %v1335 = vld [vmem:[%s1 + $0x158] sm:$0xff]
  %v1336 = vpack.c.bf16 %v1333, %v1332
  %v1337 = vpack.c.bf16 %v1335, %v1334
  %v1338 = vadd.f32 %v1300, %v1302
  %v1339 = vadd.f32 %v1338, %v1304
  %v1340 = vadd.f32 %v1339, %v1306
  %v1341 = vrot.slane %v1340, 4
  %v1342 = vadd.f32 %v1340, %v1341
  %v1343 = vrot.slane %v1342, 2
  %v1344 = vadd.f32 %v1342, %v1343
  %v1345 = vrot.slane %v1344, 1
  %v1346 = vadd.f32 %v1344, %v1345
  %v1347 = vadd.f32 %v1301, %v1303
  %v1348 = vadd.f32 %v1347, %v1305
  %v1349 = vadd.f32 %v1348, %v1307
  %v1350 = vrot.slane %v1349, 4
  %v1351 = vadd.f32 %v1349, %v1350
  %v1352 = vrot.slane %v1351, 2
  %v1353 = vadd.f32 %v1351, %v1352
  %v1354 = vrot.slane %v1353, 1
  %v1355 = vadd.f32 %v1353, %v1354
  %v1356 = vmul.f32 %v1346, %v260
  %v1357 = vmul.f32 %v1355, %v260
  %v1358 = vmul.f32 %v1300, %v1300
  %v1359 = vmul.f32 %v1301, %v1301
  %v1360 = vmul.f32 %v1302, %v1302
  %v1361 = vmul.f32 %v1303, %v1303
  %v1362 = vmul.f32 %v1304, %v1304
  %v1363 = vmul.f32 %v1305, %v1305
  %v1364 = vmul.f32 %v1306, %v1306
  %v1365 = vmul.f32 %v1307, %v1307
  %v1366 = vadd.f32 %v1358, %v1360
  %v1367 = vadd.f32 %v1366, %v1362
  %v1368 = vadd.f32 %v1367, %v1364
  %v1369 = vrot.slane %v1368, 4
  %v1370 = vadd.f32 %v1368, %v1369
  %v1371 = vrot.slane %v1370, 2
  %v1372 = vadd.f32 %v1370, %v1371
  %v1373 = vrot.slane %v1372, 1
  %v1374 = vadd.f32 %v1372, %v1373
  %v1375 = vadd.f32 %v1359, %v1361
  %v1376 = vadd.f32 %v1375, %v1363
  %v1377 = vadd.f32 %v1376, %v1365
  %v1378 = vrot.slane %v1377, 4
  %v1379 = vadd.f32 %v1377, %v1378
  %v1380 = vrot.slane %v1379, 2
  %v1381 = vadd.f32 %v1379, %v1380
  %v1382 = vrot.slane %v1381, 1
  %v1383 = vadd.f32 %v1381, %v1382
  %v1384 = vmul.f32 %v1374, %v260
  %v1385 = vmul.f32 %v1383, %v260
  %v1386 = vmul.f32 %v1356, %v1356
  %v1387 = vmul.f32 %v1357, %v1357
  %v1388 = vsub.f32 %v1384, %v1386
  %v1389 = vsub.f32 %v1385, %v1387
  %v1390 = vmax.f32 %v1388, 0.0
  %v1391 = vmax.f32 %v1389, 0.0
  %v1392 = vsub.f32 %v1300, %v1356
  %v1393 = vsub.f32 %v1301, %v1357
  %v1394 = vsub.f32 %v1302, %v1356
  %v1395 = vsub.f32 %v1303, %v1357
  %v1396 = vsub.f32 %v1304, %v1356
  %v1397 = vsub.f32 %v1305, %v1357
  %v1398 = vsub.f32 %v1306, %v1356
  %v1399 = vsub.f32 %v1307, %v1357
  %v1400 = vadd.f32 %v1390, 1e-06
  %v1401 = vadd.f32 %v1391, 1e-06
  %v1402 = vrsqrt.pop %v1400
  %v1403 = vmul.f32 %v1402, %v1400
  %v1404 = vmul.f32 %v1403, %v1402
  %v1405 = vmul.f32 0.5, %v1404
  %v1406 = vsub.f32 1.5, %v1405
  %v1407 = vmul.f32 %v1402, %v1406
  %vm1408 = vweird.f32 %v1400
  %vm1409 = vweird.f32 %v1402
  %vm1410 = vmor %vm1408, %vm1409
  %v1411 = vsel %vm1410, %v1402, %v1407
  %v1412 = vrsqrt.pop %v1401
  %v1413 = vmul.f32 %v1412, %v1401
  %v1414 = vmul.f32 %v1413, %v1412
  %v1415 = vmul.f32 0.5, %v1414
  %v1416 = vsub.f32 1.5, %v1415
  %v1417 = vmul.f32 %v1412, %v1416
  %vm1418 = vweird.f32 %v1401
  %vm1419 = vweird.f32 %v1412
  %vm1420 = vmor %vm1418, %vm1419
  %v1421 = vsel %vm1420, %v1412, %v1417
  %v1422 = vmul.f32 %v1392, %v1411
  %v1423 = vmul.f32 %v1393, %v1421
  %v1424 = vmul.f32 %v1394, %v1411
  %v1425 = vmul.f32 %v1395, %v1421
  %v1426 = vmul.f32 %v1396, %v1411
  %v1427 = vmul.f32 %v1397, %v1421
  %v1428 = vmul.f32 %v1398, %v1411
  %v1429 = vmul.f32 %v1399, %v1421
  %1430 = vset.pattern.permute.xlu0 2
  %1431 = vperm.xlu0 %1430, %v23
  %v1432 = vpop.permute.xlu0 %1431
  %1434 = vset.pattern.permute.xlu0 2
  %1435 = vperm.xlu0 %1434, %v24
  %v1436 = vpop.permute.xlu0 %1435
  %1438 = vset.pattern.permute.xlu0 2
  %1439 = vperm.xlu0 %1438, %v25
  %v1440 = vpop.permute.xlu0 %1439
  %1442 = vset.pattern.permute.xlu0 2
  %1443 = vperm.xlu0 %1442, %v26
  %v1444 = vpop.permute.xlu0 %1443
  %v1446 = vmul.f32 %v1422, %v1432
  %v1447 = vmul.f32 %v1423, %v1432
  %v1448 = vmul.f32 %v1424, %v1436
  %v1449 = vmul.f32 %v1425, %v1436
  %v1450 = vmul.f32 %v1426, %v1440
  %v1451 = vmul.f32 %v1427, %v1440
  %v1452 = vmul.f32 %v1428, %v1444
  %v1453 = vmul.f32 %v1429, %v1444
  %1454 = vset.pattern.permute.xlu0 4
  %1455 = vperm.xlu0 %1454, %v23
  %v1456 = vpop.permute.xlu0 %1455
  %1458 = vset.pattern.permute.xlu0 4
  %1459 = vperm.xlu0 %1458, %v24
  %v1460 = vpop.permute.xlu0 %1459
  %1462 = vset.pattern.permute.xlu0 4
  %1463 = vperm.xlu0 %1462, %v25
  %v1464 = vpop.permute.xlu0 %1463
  %1466 = vset.pattern.permute.xlu0 4
  %1467 = vperm.xlu0 %1466, %v26
  %v1468 = vpop.permute.xlu0 %1467
  %v1470 = vadd.f32 %v1446, %v1456
  %v1471 = vadd.f32 %v1447, %v1456
  %v1472 = vadd.f32 %v1448, %v1460
  %v1473 = vadd.f32 %v1449, %v1460
  %v1474 = vadd.f32 %v1450, %v1464
  %v1475 = vadd.f32 %v1451, %v1464
  %v1476 = vadd.f32 %v1452, %v1468
  %v1477 = vadd.f32 %v1453, %v1468
  %v1478 = vpack.c.bf16 %v1472, %v1470
  %v1479 = vpack.c.bf16 %v1473, %v1471
  %v1480 = vpack.c.bf16 %v1476, %v1474
  %v1481 = vpack.c.bf16 %v1477, %v1475
  %1482 = vset.pattern.permute.xlu0 6
  %1483 = vperm.xlu0 %1482, %v220
  %v1484 = vpop.permute.xlu0 %1483
  %1486 = vset.pattern.permute.xlu0 6
  %1487 = vperm.xlu0 %1486, %v221
  %v1488 = vpop.permute.xlu0 %1487
  %1490 = vset.pattern.permute.xlu0 6
  %1491 = vperm.xlu0 %1490, %v222
  %v1492 = vpop.permute.xlu0 %1491
  %1494 = vset.pattern.permute.xlu0 6
  %1495 = vperm.xlu0 %1494, %v223
  %v1496 = vpop.permute.xlu0 %1495
  %1498 = vset.pattern.permute.xlu0 6
  %1499 = vperm.xlu0 %1498, %v224
  %v1500 = vpop.permute.xlu0 %1499
  %1502 = vset.pattern.permute.xlu0 6
  %1503 = vperm.xlu0 %1502, %v225
  %v1504 = vpop.permute.xlu0 %1503
  %1506 = vset.pattern.permute.xlu0 6
  %1507 = vperm.xlu0 %1506, %v226
  %v1508 = vpop.permute.xlu0 %1507
  %1510 = vset.pattern.permute.xlu0 6
  %1511 = vperm.xlu0 %1510, %v227
  %v1512 = vpop.permute.xlu0 %1511
  %1514 = vset.pattern.permute.xlu0 6
  %1515 = vperm.xlu0 %1514, %v228
  %v1516 = vpop.permute.xlu0 %1515
  %1518 = vset.pattern.permute.xlu0 6
  %1519 = vperm.xlu0 %1518, %v229
  %v1520 = vpop.permute.xlu0 %1519
  %1522 = vset.pattern.permute.xlu0 6
  %1523 = vperm.xlu0 %1522, %v230
  %v1524 = vpop.permute.xlu0 %1523
  %1526 = vset.pattern.permute.xlu0 6
  %1527 = vperm.xlu0 %1526, %v231
  %v1528 = vpop.permute.xlu0 %1527
  %1530 = vset.pattern.permute.xlu0 6
  %1531 = vperm.xlu0 %1530, %v232
  %v1532 = vpop.permute.xlu0 %1531
  %1534 = vset.pattern.permute.xlu0 6
  %1535 = vperm.xlu0 %1534, %v233
  %v1536 = vpop.permute.xlu0 %1535
  %1538 = vset.pattern.permute.xlu0 6
  %1539 = vperm.xlu0 %1538, %v234
  %v1540 = vpop.permute.xlu0 %1539
  %1542 = vset.pattern.permute.xlu0 6
  %1543 = vperm.xlu0 %1542, %v235
  %v1544 = vpop.permute.xlu0 %1543
  %v1547 = vsel %vm467, %v1324, 0
  %v1550 = vsel %vm467, %v1325, 0
  %v1553 = vsel %vm467, %v1326, 0
  %v1556 = vsel %vm467, %v1327, 0
  %v1559 = vsel %vm467, %v1328, 0
  %v1562 = vsel %vm467, %v1329, 0
  %v1565 = vsel %vm467, %v1330, 0
  %v1568 = vsel %vm467, %v1331, 0
  %1570 = vmatpush.bf16.msra.mxu0 0
  %1571 = vmatpush.bf16.msra.mxu0 0
  %1572 = vmatpush.bf16.msra.mxu0 0
  %1573 = vmatpush.bf16.msra.mxu0 0
  %1574 = vmatpush.bf16.msra.mxu0 0
  %1575 = vmatpush.bf16.msra.mxu0 0
  %1576 = vmatpush.bf16.msra.mxu0 %v1480
  %1577 = vmatpush.bf16.msra.mxu0 %v1478
  %1578 = vmatmul.bf16.gmra.mxu0 %v1547
  %v1579 = vpop.f32.mrf.mxu0
  %v1580 = vadd.f32 %v1484, %v1579
  %v1581 = vpop.f32.mrf.mxu0
  %v1582 = vadd.f32 %v1488, %v1581
  %1583 = vmatmul.bf16.gmra.mxu0 %v1550
  %v1584 = vpop.f32.mrf.mxu0
  %v1585 = vadd.f32 %v1492, %v1584
  %v1586 = vpop.f32.mrf.mxu0
  %v1587 = vadd.f32 %v1496, %v1586
  %1588 = vmatmul.bf16.gmra.mxu0 %v1553
  %v1589 = vpop.f32.mrf.mxu0
  %v1590 = vadd.f32 %v1500, %v1589
  %v1591 = vpop.f32.mrf.mxu0
  %v1592 = vadd.f32 %v1504, %v1591
  %1593 = vmatmul.bf16.gmra.mxu0 %v1556
  %v1594 = vpop.f32.mrf.mxu0
  %v1595 = vadd.f32 %v1508, %v1594
  %v1596 = vpop.f32.mrf.mxu0
  %v1597 = vadd.f32 %v1512, %v1596
  %1598 = vmatmul.bf16.gmra.mxu0 %v1559
  %v1599 = vpop.f32.mrf.mxu0
  %v1600 = vadd.f32 %v1516, %v1599
  %v1601 = vpop.f32.mrf.mxu0
  %v1602 = vadd.f32 %v1520, %v1601
  %1603 = vmatmul.bf16.gmra.mxu0 %v1562
  %v1604 = vpop.f32.mrf.mxu0
  %v1605 = vadd.f32 %v1524, %v1604
  %v1606 = vpop.f32.mrf.mxu0
  %v1607 = vadd.f32 %v1528, %v1606
  %1608 = vmatmul.bf16.gmra.mxu0 %v1565
  %v1609 = vpop.f32.mrf.mxu0
  %v1610 = vadd.f32 %v1532, %v1609
  %v1611 = vpop.f32.mrf.mxu0
  %v1612 = vadd.f32 %v1536, %v1611
  %1613 = vmatmul.bf16.gmra.mxu0 %v1568
  %v1614 = vpop.f32.mrf.mxu0
  %v1615 = vadd.f32 %v1540, %v1614
  %v1616 = vpop.f32.mrf.mxu0
  %v1617 = vadd.f32 %v1544, %v1616
  %1618 = vdwg.mxu0
  %1619 = vmatpush.bf16.msra.mxu0 0
  %1620 = vmatpush.bf16.msra.mxu0 0
  %1621 = vmatpush.bf16.msra.mxu0 0
  %1622 = vmatpush.bf16.msra.mxu0 0
  %1623 = vmatpush.bf16.msra.mxu0 0
  %1624 = vmatpush.bf16.msra.mxu0 0
  %1625 = vmatpush.bf16.msra.mxu0 %v1481
  %1626 = vmatpush.bf16.msra.mxu0 %v1479
  %1627 = vmatmul.bf16.gmra.mxu0 %v1547
  %v1628 = vpop.f32.mrf.mxu0
  %v1629 = vadd.f32 %v1484, %v1628
  %v1630 = vpop.f32.mrf.mxu0
  %v1631 = vadd.f32 %v1488, %v1630
  %1632 = vmatmul.bf16.gmra.mxu0 %v1550
  %v1633 = vpop.f32.mrf.mxu0
  %v1634 = vadd.f32 %v1492, %v1633
  %v1635 = vpop.f32.mrf.mxu0
  %v1636 = vadd.f32 %v1496, %v1635
  %1637 = vmatmul.bf16.gmra.mxu0 %v1553
  %v1638 = vpop.f32.mrf.mxu0
  %v1639 = vadd.f32 %v1500, %v1638
  %v1640 = vpop.f32.mrf.mxu0
  %v1641 = vadd.f32 %v1504, %v1640
  %1642 = vmatmul.bf16.gmra.mxu0 %v1556
  %v1643 = vpop.f32.mrf.mxu0
  %v1644 = vadd.f32 %v1508, %v1643
  %v1645 = vpop.f32.mrf.mxu0
  %v1646 = vadd.f32 %v1512, %v1645
  %1647 = vmatmul.bf16.gmra.mxu0 %v1559
  %v1648 = vpop.f32.mrf.mxu0
  %v1649 = vadd.f32 %v1516, %v1648
  %v1650 = vpop.f32.mrf.mxu0
  %v1651 = vadd.f32 %v1520, %v1650
  %1652 = vmatmul.bf16.gmra.mxu0 %v1562
  %v1653 = vpop.f32.mrf.mxu0
  %v1654 = vadd.f32 %v1524, %v1653
  %v1655 = vpop.f32.mrf.mxu0
  %v1656 = vadd.f32 %v1528, %v1655
  %1657 = vmatmul.bf16.gmra.mxu0 %v1565
  %v1658 = vpop.f32.mrf.mxu0
  %v1659 = vadd.f32 %v1532, %v1658
  %v1660 = vpop.f32.mrf.mxu0
  %v1661 = vadd.f32 %v1536, %v1660
  %1662 = vmatmul.bf16.gmra.mxu0 %v1568
  %v1663 = vpop.f32.mrf.mxu0
  %v1664 = vadd.f32 %v1540, %v1663
  %v1665 = vpop.f32.mrf.mxu0
  %v1666 = vadd.f32 %v1544, %v1665
  %1667 = vdwg.mxu0
  %v1668 = vxor.u32 %v1580, 2147483648
  %v1669 = vxor.u32 %v1629, 2147483648
  %v1670 = vxor.u32 %v1582, 2147483648
  %v1671 = vxor.u32 %v1631, 2147483648
  %v1672 = vxor.u32 %v1585, 2147483648
  %v1673 = vxor.u32 %v1634, 2147483648
  %v1674 = vxor.u32 %v1587, 2147483648
  %v1675 = vxor.u32 %v1636, 2147483648
  %v1676 = vxor.u32 %v1590, 2147483648
  %v1677 = vxor.u32 %v1639, 2147483648
  %v1678 = vxor.u32 %v1592, 2147483648
  %v1679 = vxor.u32 %v1641, 2147483648
  %v1680 = vxor.u32 %v1595, 2147483648
  %v1681 = vxor.u32 %v1644, 2147483648
  %v1682 = vxor.u32 %v1597, 2147483648
  %v1683 = vxor.u32 %v1646, 2147483648
  %v1684 = vxor.u32 %v1600, 2147483648
  %v1685 = vxor.u32 %v1649, 2147483648
  %v1686 = vxor.u32 %v1602, 2147483648
  %v1687 = vxor.u32 %v1651, 2147483648
  %v1688 = vxor.u32 %v1605, 2147483648
  %v1689 = vxor.u32 %v1654, 2147483648
  %v1690 = vxor.u32 %v1607, 2147483648
  %v1691 = vxor.u32 %v1656, 2147483648
  %v1692 = vxor.u32 %v1610, 2147483648
  %v1693 = vxor.u32 %v1659, 2147483648
  %v1694 = vxor.u32 %v1612, 2147483648
  %v1695 = vxor.u32 %v1661, 2147483648
  %v1696 = vxor.u32 %v1615, 2147483648
  %v1697 = vxor.u32 %v1664, 2147483648
  %v1698 = vxor.u32 %v1617, 2147483648
  %v1699 = vxor.u32 %v1666, 2147483648
  %v1700 = vmul.f32 %v1668, 1.442695
  %v1701 = vpow.pop %v1700
  %v1702 = vmul.f32 %v1669, 1.442695
  %v1703 = vpow.pop %v1702
  %v1704 = vmul.f32 %v1670, 1.442695
  %v1705 = vpow.pop %v1704
  %v1706 = vmul.f32 %v1671, 1.442695
  %v1707 = vpow.pop %v1706
  %v1708 = vmul.f32 %v1672, 1.442695
  %v1709 = vpow.pop %v1708
  %v1710 = vmul.f32 %v1673, 1.442695
  %v1711 = vpow.pop %v1710
  %v1712 = vmul.f32 %v1674, 1.442695
  %v1713 = vpow.pop %v1712
  %v1714 = vmul.f32 %v1675, 1.442695
  %v1715 = vpow.pop %v1714
  %v1716 = vmul.f32 %v1676, 1.442695
  %v1717 = vpow.pop %v1716
  %v1718 = vmul.f32 %v1677, 1.442695
  %v1719 = vpow.pop %v1718
  %v1720 = vmul.f32 %v1678, 1.442695
  %v1721 = vpow.pop %v1720
  %v1722 = vmul.f32 %v1679, 1.442695
  %v1723 = vpow.pop %v1722
  %v1724 = vmul.f32 %v1680, 1.442695
  %v1725 = vpow.pop %v1724
  %v1726 = vmul.f32 %v1681, 1.442695
  %v1727 = vpow.pop %v1726
  %v1728 = vmul.f32 %v1682, 1.442695
  %v1729 = vpow.pop %v1728
  %v1730 = vmul.f32 %v1683, 1.442695
  %v1731 = vpow.pop %v1730
  %v1732 = vmul.f32 %v1684, 1.442695
  %v1733 = vpow.pop %v1732
  %v1734 = vmul.f32 %v1685, 1.442695
  %v1735 = vpow.pop %v1734
  %v1736 = vmul.f32 %v1686, 1.442695
  %v1737 = vpow.pop %v1736
  %v1738 = vmul.f32 %v1687, 1.442695
  %v1739 = vpow.pop %v1738
  %v1740 = vmul.f32 %v1688, 1.442695
  %v1741 = vpow.pop %v1740
  %v1742 = vmul.f32 %v1689, 1.442695
  %v1743 = vpow.pop %v1742
  %v1744 = vmul.f32 %v1690, 1.442695
  %v1745 = vpow.pop %v1744
  %v1746 = vmul.f32 %v1691, 1.442695
  %v1747 = vpow.pop %v1746
  %v1748 = vmul.f32 %v1692, 1.442695
  %v1749 = vpow.pop %v1748
  %v1750 = vmul.f32 %v1693, 1.442695
  %v1751 = vpow.pop %v1750
  %v1752 = vmul.f32 %v1694, 1.442695
  %v1753 = vpow.pop %v1752
  %v1754 = vmul.f32 %v1695, 1.442695
  %v1755 = vpow.pop %v1754
  %v1756 = vmul.f32 %v1696, 1.442695
  %v1757 = vpow.pop %v1756
  %v1758 = vmul.f32 %v1697, 1.442695
  %v1759 = vpow.pop %v1758
  %v1760 = vmul.f32 %v1698, 1.442695
  %v1761 = vpow.pop %v1760
  %v1762 = vmul.f32 %v1699, 1.442695
  %v1763 = vpow.pop %v1762
  %v1764 = vadd.f32 %v1701, 1.0
  %v1765 = vadd.f32 %v1703, 1.0
  %v1766 = vadd.f32 %v1705, 1.0
  %v1767 = vadd.f32 %v1707, 1.0
  %v1768 = vadd.f32 %v1709, 1.0
  %v1769 = vadd.f32 %v1711, 1.0
  %v1770 = vadd.f32 %v1713, 1.0
  %v1771 = vadd.f32 %v1715, 1.0
  %v1772 = vadd.f32 %v1717, 1.0
  %v1773 = vadd.f32 %v1719, 1.0
  %v1774 = vadd.f32 %v1721, 1.0
  %v1775 = vadd.f32 %v1723, 1.0
  %v1776 = vadd.f32 %v1725, 1.0
  %v1777 = vadd.f32 %v1727, 1.0
  %v1778 = vadd.f32 %v1729, 1.0
  %v1779 = vadd.f32 %v1731, 1.0
  %v1780 = vadd.f32 %v1733, 1.0
  %v1781 = vadd.f32 %v1735, 1.0
  %v1782 = vadd.f32 %v1737, 1.0
  %v1783 = vadd.f32 %v1739, 1.0
  %v1784 = vadd.f32 %v1741, 1.0
  %v1785 = vadd.f32 %v1743, 1.0
  %v1786 = vadd.f32 %v1745, 1.0
  %v1787 = vadd.f32 %v1747, 1.0
  %v1788 = vadd.f32 %v1749, 1.0
  %v1789 = vadd.f32 %v1751, 1.0
  %v1790 = vadd.f32 %v1753, 1.0
  %v1791 = vadd.f32 %v1755, 1.0
  %v1792 = vadd.f32 %v1757, 1.0
  %v1793 = vadd.f32 %v1759, 1.0
  %v1794 = vadd.f32 %v1761, 1.0
  %v1795 = vadd.f32 %v1763, 1.0
  %v1796 = vrcp.pop %v1764
  %v1797 = vmul.f32 %v1764, %v1796
  %v1798 = vsub.f32 1.0, %v1797
  %v1799 = vmul.f32 %v1796, %v1798
  %v1800 = vadd.f32 %v1796, %v1799
  %vm1801 = vweird.f32 %v1764
  %vm1802 = vweird.f32 %v1796
  %vm1803 = vmor %vm1801, %vm1802
  %v1804 = vsel %vm1803, %v1796, %v1800
  %v1805 = vand.u32 2147483647, %v1764
  %vm1806 = vcmp.eq.f32.partialorder %v1805, 8.507059e+37
  %v1807 = vand.u32 %v1764, 2147483648
  %v1808 = vor.u32 1.1754944e-38, %v1807
  %v1809 = vsel %vm1806, %v1808, %v1804
  %v1810 = vmul.f32 1.0, %v1809
  %v1811 = vrcp.pop %v1765
  %v1812 = vmul.f32 %v1765, %v1811
  %v1813 = vsub.f32 1.0, %v1812
  %v1814 = vmul.f32 %v1811, %v1813
  %v1815 = vadd.f32 %v1811, %v1814
  %vm1816 = vweird.f32 %v1765
  %vm1817 = vweird.f32 %v1811
  %vm1818 = vmor %vm1816, %vm1817
  %v1819 = vsel %vm1818, %v1811, %v1815
  %v1820 = vand.u32 2147483647, %v1765
  %vm1821 = vcmp.eq.f32.partialorder %v1820, 8.507059e+37
  %v1822 = vand.u32 %v1765, 2147483648
  %v1823 = vor.u32 1.1754944e-38, %v1822
  %v1824 = vsel %vm1821, %v1823, %v1819
  %v1825 = vmul.f32 1.0, %v1824
  %v1826 = vrcp.pop %v1766
  %v1827 = vmul.f32 %v1766, %v1826
  %v1828 = vsub.f32 1.0, %v1827
  %v1829 = vmul.f32 %v1826, %v1828
  %v1830 = vadd.f32 %v1826, %v1829
  %vm1831 = vweird.f32 %v1766
  %vm1832 = vweird.f32 %v1826
  %vm1833 = vmor %vm1831, %vm1832
  %v1834 = vsel %vm1833, %v1826, %v1830
  %v1835 = vand.u32 2147483647, %v1766
  %vm1836 = vcmp.eq.f32.partialorder %v1835, 8.507059e+37
  %v1837 = vand.u32 %v1766, 2147483648
  %v1838 = vor.u32 1.1754944e-38, %v1837
  %v1839 = vsel %vm1836, %v1838, %v1834
  %v1840 = vmul.f32 1.0, %v1839
  %v1841 = vrcp.pop %v1767
  %v1842 = vmul.f32 %v1767, %v1841
  %v1843 = vsub.f32 1.0, %v1842
  %v1844 = vmul.f32 %v1841, %v1843
  %v1845 = vadd.f32 %v1841, %v1844
  %vm1846 = vweird.f32 %v1767
  %vm1847 = vweird.f32 %v1841
  %vm1848 = vmor %vm1846, %vm1847
  %v1849 = vsel %vm1848, %v1841, %v1845
  %v1850 = vand.u32 2147483647, %v1767
  %vm1851 = vcmp.eq.f32.partialorder %v1850, 8.507059e+37
  %v1852 = vand.u32 %v1767, 2147483648
  %v1853 = vor.u32 1.1754944e-38, %v1852
  %v1854 = vsel %vm1851, %v1853, %v1849
  %v1855 = vmul.f32 1.0, %v1854
  %v1856 = vrcp.pop %v1768
  %v1857 = vmul.f32 %v1768, %v1856
  %v1858 = vsub.f32 1.0, %v1857
  %v1859 = vmul.f32 %v1856, %v1858
  %v1860 = vadd.f32 %v1856, %v1859
  %vm1861 = vweird.f32 %v1768
  %vm1862 = vweird.f32 %v1856
  %vm1863 = vmor %vm1861, %vm1862
  %v1864 = vsel %vm1863, %v1856, %v1860
  %v1865 = vand.u32 2147483647, %v1768
  %vm1866 = vcmp.eq.f32.partialorder %v1865, 8.507059e+37
  %v1867 = vand.u32 %v1768, 2147483648
  %v1868 = vor.u32 1.1754944e-38, %v1867
  %v1869 = vsel %vm1866, %v1868, %v1864
  %v1870 = vmul.f32 1.0, %v1869
  %v1871 = vrcp.pop %v1769
  %v1872 = vmul.f32 %v1769, %v1871
  %v1873 = vsub.f32 1.0, %v1872
  %v1874 = vmul.f32 %v1871, %v1873
  %v1875 = vadd.f32 %v1871, %v1874
  %vm1876 = vweird.f32 %v1769
  %vm1877 = vweird.f32 %v1871
  %vm1878 = vmor %vm1876, %vm1877
  %v1879 = vsel %vm1878, %v1871, %v1875
  %v1880 = vand.u32 2147483647, %v1769
  %vm1881 = vcmp.eq.f32.partialorder %v1880, 8.507059e+37
  %v1882 = vand.u32 %v1769, 2147483648
  %v1883 = vor.u32 1.1754944e-38, %v1882
  %v1884 = vsel %vm1881, %v1883, %v1879
  %v1885 = vmul.f32 1.0, %v1884
  %v1886 = vrcp.pop %v1770
  %v1887 = vmul.f32 %v1770, %v1886
  %v1888 = vsub.f32 1.0, %v1887
  %v1889 = vmul.f32 %v1886, %v1888
  %v1890 = vadd.f32 %v1886, %v1889
  %vm1891 = vweird.f32 %v1770
  %vm1892 = vweird.f32 %v1886
  %vm1893 = vmor %vm1891, %vm1892
  %v1894 = vsel %vm1893, %v1886, %v1890
  %v1895 = vand.u32 2147483647, %v1770
  %vm1896 = vcmp.eq.f32.partialorder %v1895, 8.507059e+37
  %v1897 = vand.u32 %v1770, 2147483648
  %v1898 = vor.u32 1.1754944e-38, %v1897
  %v1899 = vsel %vm1896, %v1898, %v1894
  %v1900 = vmul.f32 1.0, %v1899
  %v1901 = vrcp.pop %v1771
  %v1902 = vmul.f32 %v1771, %v1901
  %v1903 = vsub.f32 1.0, %v1902
  %v1904 = vmul.f32 %v1901, %v1903
  %v1905 = vadd.f32 %v1901, %v1904
  %vm1906 = vweird.f32 %v1771
  %vm1907 = vweird.f32 %v1901
  %vm1908 = vmor %vm1906, %vm1907
  %v1909 = vsel %vm1908, %v1901, %v1905
  %v1910 = vand.u32 2147483647, %v1771
  %vm1911 = vcmp.eq.f32.partialorder %v1910, 8.507059e+37
  %v1912 = vand.u32 %v1771, 2147483648
  %v1913 = vor.u32 1.1754944e-38, %v1912
  %v1914 = vsel %vm1911, %v1913, %v1909
  %v1915 = vmul.f32 1.0, %v1914
  %v1916 = vrcp.pop %v1772
  %v1917 = vmul.f32 %v1772, %v1916
  %v1918 = vsub.f32 1.0, %v1917
  %v1919 = vmul.f32 %v1916, %v1918
  %v1920 = vadd.f32 %v1916, %v1919
  %vm1921 = vweird.f32 %v1772
  %vm1922 = vweird.f32 %v1916
  %vm1923 = vmor %vm1921, %vm1922
  %v1924 = vsel %vm1923, %v1916, %v1920
  %v1925 = vand.u32 2147483647, %v1772
  %vm1926 = vcmp.eq.f32.partialorder %v1925, 8.507059e+37
  %v1927 = vand.u32 %v1772, 2147483648
  %v1928 = vor.u32 1.1754944e-38, %v1927
  %v1929 = vsel %vm1926, %v1928, %v1924
  %v1930 = vmul.f32 1.0, %v1929
  %v1931 = vrcp.pop %v1773
  %v1932 = vmul.f32 %v1773, %v1931
  %v1933 = vsub.f32 1.0, %v1932
  %v1934 = vmul.f32 %v1931, %v1933
  %v1935 = vadd.f32 %v1931, %v1934
  %vm1936 = vweird.f32 %v1773
  %vm1937 = vweird.f32 %v1931
  %vm1938 = vmor %vm1936, %vm1937
  %v1939 = vsel %vm1938, %v1931, %v1935
  %v1940 = vand.u32 2147483647, %v1773
  %vm1941 = vcmp.eq.f32.partialorder %v1940, 8.507059e+37
  %v1942 = vand.u32 %v1773, 2147483648
  %v1943 = vor.u32 1.1754944e-38, %v1942
  %v1944 = vsel %vm1941, %v1943, %v1939
  %v1945 = vmul.f32 1.0, %v1944
  %v1946 = vrcp.pop %v1774
  %v1947 = vmul.f32 %v1774, %v1946
  %v1948 = vsub.f32 1.0, %v1947
  %v1949 = vmul.f32 %v1946, %v1948
  %v1950 = vadd.f32 %v1946, %v1949
  %vm1951 = vweird.f32 %v1774
  %vm1952 = vweird.f32 %v1946
  %vm1953 = vmor %vm1951, %vm1952
  %v1954 = vsel %vm1953, %v1946, %v1950
  %v1955 = vand.u32 2147483647, %v1774
  %vm1956 = vcmp.eq.f32.partialorder %v1955, 8.507059e+37
  %v1957 = vand.u32 %v1774, 2147483648
  %v1958 = vor.u32 1.1754944e-38, %v1957
  %v1959 = vsel %vm1956, %v1958, %v1954
  %v1960 = vmul.f32 1.0, %v1959
  %v1961 = vrcp.pop %v1775
  %v1962 = vmul.f32 %v1775, %v1961
  %v1963 = vsub.f32 1.0, %v1962
  %v1964 = vmul.f32 %v1961, %v1963
  %v1965 = vadd.f32 %v1961, %v1964
  %vm1966 = vweird.f32 %v1775
  %vm1967 = vweird.f32 %v1961
  %vm1968 = vmor %vm1966, %vm1967
  %v1969 = vsel %vm1968, %v1961, %v1965
  %v1970 = vand.u32 2147483647, %v1775
  %vm1971 = vcmp.eq.f32.partialorder %v1970, 8.507059e+37
  %v1972 = vand.u32 %v1775, 2147483648
  %v1973 = vor.u32 1.1754944e-38, %v1972
  %v1974 = vsel %vm1971, %v1973, %v1969
  %v1975 = vmul.f32 1.0, %v1974
  %v1976 = vrcp.pop %v1776
  %v1977 = vmul.f32 %v1776, %v1976
  %v1978 = vsub.f32 1.0, %v1977
  %v1979 = vmul.f32 %v1976, %v1978
  %v1980 = vadd.f32 %v1976, %v1979
  %vm1981 = vweird.f32 %v1776
  %vm1982 = vweird.f32 %v1976
  %vm1983 = vmor %vm1981, %vm1982
  %v1984 = vsel %vm1983, %v1976, %v1980
  %v1985 = vand.u32 2147483647, %v1776
  %vm1986 = vcmp.eq.f32.partialorder %v1985, 8.507059e+37
  %v1987 = vand.u32 %v1776, 2147483648
  %v1988 = vor.u32 1.1754944e-38, %v1987
  %v1989 = vsel %vm1986, %v1988, %v1984
  %v1990 = vmul.f32 1.0, %v1989
  %v1991 = vrcp.pop %v1777
  %v1992 = vmul.f32 %v1777, %v1991
  %v1993 = vsub.f32 1.0, %v1992
  %v1994 = vmul.f32 %v1991, %v1993
  %v1995 = vadd.f32 %v1991, %v1994
  %vm1996 = vweird.f32 %v1777
  %vm1997 = vweird.f32 %v1991
  %vm1998 = vmor %vm1996, %vm1997
  %v1999 = vsel %vm1998, %v1991, %v1995
  %v2000 = vand.u32 2147483647, %v1777
  %vm2001 = vcmp.eq.f32.partialorder %v2000, 8.507059e+37
  %v2002 = vand.u32 %v1777, 2147483648
  %v2003 = vor.u32 1.1754944e-38, %v2002
  %v2004 = vsel %vm2001, %v2003, %v1999
  %v2005 = vmul.f32 1.0, %v2004
  %v2006 = vrcp.pop %v1778
  %v2007 = vmul.f32 %v1778, %v2006
  %v2008 = vsub.f32 1.0, %v2007
  %v2009 = vmul.f32 %v2006, %v2008
  %v2010 = vadd.f32 %v2006, %v2009
  %vm2011 = vweird.f32 %v1778
  %vm2012 = vweird.f32 %v2006
  %vm2013 = vmor %vm2011, %vm2012
  %v2014 = vsel %vm2013, %v2006, %v2010
  %v2015 = vand.u32 2147483647, %v1778
  %vm2016 = vcmp.eq.f32.partialorder %v2015, 8.507059e+37
  %v2017 = vand.u32 %v1778, 2147483648
  %v2018 = vor.u32 1.1754944e-38, %v2017
  %v2019 = vsel %vm2016, %v2018, %v2014
  %v2020 = vmul.f32 1.0, %v2019
  %v2021 = vrcp.pop %v1779
  %v2022 = vmul.f32 %v1779, %v2021
  %v2023 = vsub.f32 1.0, %v2022
  %v2024 = vmul.f32 %v2021, %v2023
  %v2025 = vadd.f32 %v2021, %v2024
  %vm2026 = vweird.f32 %v1779
  %vm2027 = vweird.f32 %v2021
  %vm2028 = vmor %vm2026, %vm2027
  %v2029 = vsel %vm2028, %v2021, %v2025
  %v2030 = vand.u32 2147483647, %v1779
  %vm2031 = vcmp.eq.f32.partialorder %v2030, 8.507059e+37
  %v2032 = vand.u32 %v1779, 2147483648
  %v2033 = vor.u32 1.1754944e-38, %v2032
  %v2034 = vsel %vm2031, %v2033, %v2029
  %v2035 = vmul.f32 1.0, %v2034
  %v2036 = vrcp.pop %v1780
  %v2037 = vmul.f32 %v1780, %v2036
  %v2038 = vsub.f32 1.0, %v2037
  %v2039 = vmul.f32 %v2036, %v2038
  %v2040 = vadd.f32 %v2036, %v2039
  %vm2041 = vweird.f32 %v1780
  %vm2042 = vweird.f32 %v2036
  %vm2043 = vmor %vm2041, %vm2042
  %v2044 = vsel %vm2043, %v2036, %v2040
  %v2045 = vand.u32 2147483647, %v1780
  %vm2046 = vcmp.eq.f32.partialorder %v2045, 8.507059e+37
  %v2047 = vand.u32 %v1780, 2147483648
  %v2048 = vor.u32 1.1754944e-38, %v2047
  %v2049 = vsel %vm2046, %v2048, %v2044
  %v2050 = vmul.f32 1.0, %v2049
  %v2051 = vrcp.pop %v1781
  %v2052 = vmul.f32 %v1781, %v2051
  %v2053 = vsub.f32 1.0, %v2052
  %v2054 = vmul.f32 %v2051, %v2053
  %v2055 = vadd.f32 %v2051, %v2054
  %vm2056 = vweird.f32 %v1781
  %vm2057 = vweird.f32 %v2051
  %vm2058 = vmor %vm2056, %vm2057
  %v2059 = vsel %vm2058, %v2051, %v2055
  %v2060 = vand.u32 2147483647, %v1781
  %vm2061 = vcmp.eq.f32.partialorder %v2060, 8.507059e+37
  %v2062 = vand.u32 %v1781, 2147483648
  %v2063 = vor.u32 1.1754944e-38, %v2062
  %v2064 = vsel %vm2061, %v2063, %v2059
  %v2065 = vmul.f32 1.0, %v2064
  %v2066 = vrcp.pop %v1782
  %v2067 = vmul.f32 %v1782, %v2066
  %v2068 = vsub.f32 1.0, %v2067
  %v2069 = vmul.f32 %v2066, %v2068
  %v2070 = vadd.f32 %v2066, %v2069
  %vm2071 = vweird.f32 %v1782
  %vm2072 = vweird.f32 %v2066
  %vm2073 = vmor %vm2071, %vm2072
  %v2074 = vsel %vm2073, %v2066, %v2070
  %v2075 = vand.u32 2147483647, %v1782
  %vm2076 = vcmp.eq.f32.partialorder %v2075, 8.507059e+37
  %v2077 = vand.u32 %v1782, 2147483648
  %v2078 = vor.u32 1.1754944e-38, %v2077
  %v2079 = vsel %vm2076, %v2078, %v2074
  %v2080 = vmul.f32 1.0, %v2079
  %v2081 = vrcp.pop %v1783
  %v2082 = vmul.f32 %v1783, %v2081
  %v2083 = vsub.f32 1.0, %v2082
  %v2084 = vmul.f32 %v2081, %v2083
  %v2085 = vadd.f32 %v2081, %v2084
  %vm2086 = vweird.f32 %v1783
  %vm2087 = vweird.f32 %v2081
  %vm2088 = vmor %vm2086, %vm2087
  %v2089 = vsel %vm2088, %v2081, %v2085
  %v2090 = vand.u32 2147483647, %v1783
  %vm2091 = vcmp.eq.f32.partialorder %v2090, 8.507059e+37
  %v2092 = vand.u32 %v1783, 2147483648
  %v2093 = vor.u32 1.1754944e-38, %v2092
  %v2094 = vsel %vm2091, %v2093, %v2089
  %v2095 = vmul.f32 1.0, %v2094
  %v2096 = vrcp.pop %v1784
  %v2097 = vmul.f32 %v1784, %v2096
  %v2098 = vsub.f32 1.0, %v2097
  %v2099 = vmul.f32 %v2096, %v2098
  %v2100 = vadd.f32 %v2096, %v2099
  %vm2101 = vweird.f32 %v1784
  %vm2102 = vweird.f32 %v2096
  %vm2103 = vmor %vm2101, %vm2102
  %v2104 = vsel %vm2103, %v2096, %v2100
  %v2105 = vand.u32 2147483647, %v1784
  %vm2106 = vcmp.eq.f32.partialorder %v2105, 8.507059e+37
  %v2107 = vand.u32 %v1784, 2147483648
  %v2108 = vor.u32 1.1754944e-38, %v2107
  %v2109 = vsel %vm2106, %v2108, %v2104
  %v2110 = vmul.f32 1.0, %v2109
  %v2111 = vrcp.pop %v1785
  %v2112 = vmul.f32 %v1785, %v2111
  %v2113 = vsub.f32 1.0, %v2112
  %v2114 = vmul.f32 %v2111, %v2113
  %v2115 = vadd.f32 %v2111, %v2114
  %vm2116 = vweird.f32 %v1785
  %vm2117 = vweird.f32 %v2111
  %vm2118 = vmor %vm2116, %vm2117
  %v2119 = vsel %vm2118, %v2111, %v2115
  %v2120 = vand.u32 2147483647, %v1785
  %vm2121 = vcmp.eq.f32.partialorder %v2120, 8.507059e+37
  %v2122 = vand.u32 %v1785, 2147483648
  %v2123 = vor.u32 1.1754944e-38, %v2122
  %v2124 = vsel %vm2121, %v2123, %v2119
  %v2125 = vmul.f32 1.0, %v2124
  %v2126 = vrcp.pop %v1786
  %v2127 = vmul.f32 %v1786, %v2126
  %v2128 = vsub.f32 1.0, %v2127
  %v2129 = vmul.f32 %v2126, %v2128
  %v2130 = vadd.f32 %v2126, %v2129
  %vm2131 = vweird.f32 %v1786
  %vm2132 = vweird.f32 %v2126
  %vm2133 = vmor %vm2131, %vm2132
  %v2134 = vsel %vm2133, %v2126, %v2130
  %v2135 = vand.u32 2147483647, %v1786
  %vm2136 = vcmp.eq.f32.partialorder %v2135, 8.507059e+37
  %v2137 = vand.u32 %v1786, 2147483648
  %v2138 = vor.u32 1.1754944e-38, %v2137
  %v2139 = vsel %vm2136, %v2138, %v2134
  %v2140 = vmul.f32 1.0, %v2139
  %v2141 = vrcp.pop %v1787
  %v2142 = vmul.f32 %v1787, %v2141
  %v2143 = vsub.f32 1.0, %v2142
  %v2144 = vmul.f32 %v2141, %v2143
  %v2145 = vadd.f32 %v2141, %v2144
  %vm2146 = vweird.f32 %v1787
  %vm2147 = vweird.f32 %v2141
  %vm2148 = vmor %vm2146, %vm2147
  %v2149 = vsel %vm2148, %v2141, %v2145
  %v2150 = vand.u32 2147483647, %v1787
  %vm2151 = vcmp.eq.f32.partialorder %v2150, 8.507059e+37
  %v2152 = vand.u32 %v1787, 2147483648
  %v2153 = vor.u32 1.1754944e-38, %v2152
  %v2154 = vsel %vm2151, %v2153, %v2149
  %v2155 = vmul.f32 1.0, %v2154
  %v2156 = vrcp.pop %v1788
  %v2157 = vmul.f32 %v1788, %v2156
  %v2158 = vsub.f32 1.0, %v2157
  %v2159 = vmul.f32 %v2156, %v2158
  %v2160 = vadd.f32 %v2156, %v2159
  %vm2161 = vweird.f32 %v1788
  %vm2162 = vweird.f32 %v2156
  %vm2163 = vmor %vm2161, %vm2162
  %v2164 = vsel %vm2163, %v2156, %v2160
  %v2165 = vand.u32 2147483647, %v1788
  %vm2166 = vcmp.eq.f32.partialorder %v2165, 8.507059e+37
  %v2167 = vand.u32 %v1788, 2147483648
  %v2168 = vor.u32 1.1754944e-38, %v2167
  %v2169 = vsel %vm2166, %v2168, %v2164
  %v2170 = vmul.f32 1.0, %v2169
  %v2171 = vrcp.pop %v1789
  %v2172 = vmul.f32 %v1789, %v2171
  %v2173 = vsub.f32 1.0, %v2172
  %v2174 = vmul.f32 %v2171, %v2173
  %v2175 = vadd.f32 %v2171, %v2174
  %vm2176 = vweird.f32 %v1789
  %vm2177 = vweird.f32 %v2171
  %vm2178 = vmor %vm2176, %vm2177
  %v2179 = vsel %vm2178, %v2171, %v2175
  %v2180 = vand.u32 2147483647, %v1789
  %vm2181 = vcmp.eq.f32.partialorder %v2180, 8.507059e+37
  %v2182 = vand.u32 %v1789, 2147483648
  %v2183 = vor.u32 1.1754944e-38, %v2182
  %v2184 = vsel %vm2181, %v2183, %v2179
  %v2185 = vmul.f32 1.0, %v2184
  %v2186 = vrcp.pop %v1790
  %v2187 = vmul.f32 %v1790, %v2186
  %v2188 = vsub.f32 1.0, %v2187
  %v2189 = vmul.f32 %v2186, %v2188
  %v2190 = vadd.f32 %v2186, %v2189
  %vm2191 = vweird.f32 %v1790
  %vm2192 = vweird.f32 %v2186
  %vm2193 = vmor %vm2191, %vm2192
  %v2194 = vsel %vm2193, %v2186, %v2190
  %v2195 = vand.u32 2147483647, %v1790
  %vm2196 = vcmp.eq.f32.partialorder %v2195, 8.507059e+37
  %v2197 = vand.u32 %v1790, 2147483648
  %v2198 = vor.u32 1.1754944e-38, %v2197
  %v2199 = vsel %vm2196, %v2198, %v2194
  %v2200 = vmul.f32 1.0, %v2199
  %v2201 = vrcp.pop %v1791
  %v2202 = vmul.f32 %v1791, %v2201
  %v2203 = vsub.f32 1.0, %v2202
  %v2204 = vmul.f32 %v2201, %v2203
  %v2205 = vadd.f32 %v2201, %v2204
  %vm2206 = vweird.f32 %v1791
  %vm2207 = vweird.f32 %v2201
  %vm2208 = vmor %vm2206, %vm2207
  %v2209 = vsel %vm2208, %v2201, %v2205
  %v2210 = vand.u32 2147483647, %v1791
  %vm2211 = vcmp.eq.f32.partialorder %v2210, 8.507059e+37
  %v2212 = vand.u32 %v1791, 2147483648
  %v2213 = vor.u32 1.1754944e-38, %v2212
  %v2214 = vsel %vm2211, %v2213, %v2209
  %v2215 = vmul.f32 1.0, %v2214
  %v2216 = vrcp.pop %v1792
  %v2217 = vmul.f32 %v1792, %v2216
  %v2218 = vsub.f32 1.0, %v2217
  %v2219 = vmul.f32 %v2216, %v2218
  %v2220 = vadd.f32 %v2216, %v2219
  %vm2221 = vweird.f32 %v1792
  %vm2222 = vweird.f32 %v2216
  %vm2223 = vmor %vm2221, %vm2222
  %v2224 = vsel %vm2223, %v2216, %v2220
  %v2225 = vand.u32 2147483647, %v1792
  %vm2226 = vcmp.eq.f32.partialorder %v2225, 8.507059e+37
  %v2227 = vand.u32 %v1792, 2147483648
  %v2228 = vor.u32 1.1754944e-38, %v2227
  %v2229 = vsel %vm2226, %v2228, %v2224
  %v2230 = vmul.f32 1.0, %v2229
  %v2231 = vrcp.pop %v1793
  %v2232 = vmul.f32 %v1793, %v2231
  %v2233 = vsub.f32 1.0, %v2232
  %v2234 = vmul.f32 %v2231, %v2233
  %v2235 = vadd.f32 %v2231, %v2234
  %vm2236 = vweird.f32 %v1793
  %vm2237 = vweird.f32 %v2231
  %vm2238 = vmor %vm2236, %vm2237
  %v2239 = vsel %vm2238, %v2231, %v2235
  %v2240 = vand.u32 2147483647, %v1793
  %vm2241 = vcmp.eq.f32.partialorder %v2240, 8.507059e+37
  %v2242 = vand.u32 %v1793, 2147483648
  %v2243 = vor.u32 1.1754944e-38, %v2242
  %v2244 = vsel %vm2241, %v2243, %v2239
  %v2245 = vmul.f32 1.0, %v2244
  %v2246 = vrcp.pop %v1794
  %v2247 = vmul.f32 %v1794, %v2246
  %v2248 = vsub.f32 1.0, %v2247
  %v2249 = vmul.f32 %v2246, %v2248
  %v2250 = vadd.f32 %v2246, %v2249
  %vm2251 = vweird.f32 %v1794
  %vm2252 = vweird.f32 %v2246
  %vm2253 = vmor %vm2251, %vm2252
  %v2254 = vsel %vm2253, %v2246, %v2250
  %v2255 = vand.u32 2147483647, %v1794
  %vm2256 = vcmp.eq.f32.partialorder %v2255, 8.507059e+37
  %v2257 = vand.u32 %v1794, 2147483648
  %v2258 = vor.u32 1.1754944e-38, %v2257
  %v2259 = vsel %vm2256, %v2258, %v2254
  %v2260 = vmul.f32 1.0, %v2259
  %v2261 = vrcp.pop %v1795
  %v2262 = vmul.f32 %v1795, %v2261
  %v2263 = vsub.f32 1.0, %v2262
  %v2264 = vmul.f32 %v2261, %v2263
  %v2265 = vadd.f32 %v2261, %v2264
  %vm2266 = vweird.f32 %v1795
  %vm2267 = vweird.f32 %v2261
  %vm2268 = vmor %vm2266, %vm2267
  %v2269 = vsel %vm2268, %v2261, %v2265
  %v2270 = vand.u32 2147483647, %v1795
  %vm2271 = vcmp.eq.f32.partialorder %v2270, 8.507059e+37
  %v2272 = vand.u32 %v1795, 2147483648
  %v2273 = vor.u32 1.1754944e-38, %v2272
  %v2274 = vsel %vm2271, %v2273, %v2269
  %v2275 = vmul.f32 1.0, %v2274
  %v2276 = vmul.f32 %v1580, %v1810
  %v2277 = vmul.f32 %v1629, %v1825
  %v2278 = vmul.f32 %v1582, %v1840
  %v2279 = vmul.f32 %v1631, %v1855
  %v2280 = vmul.f32 %v1585, %v1870
  %v2281 = vmul.f32 %v1634, %v1885
  %v2282 = vmul.f32 %v1587, %v1900
  %v2283 = vmul.f32 %v1636, %v1915
  %v2284 = vmul.f32 %v1590, %v1930
  %v2285 = vmul.f32 %v1639, %v1945
  %v2286 = vmul.f32 %v1592, %v1960
  %v2287 = vmul.f32 %v1641, %v1975
  %v2288 = vmul.f32 %v1595, %v1990
  %v2289 = vmul.f32 %v1644, %v2005
  %v2290 = vmul.f32 %v1597, %v2020
  %v2291 = vmul.f32 %v1646, %v2035
  %v2292 = vmul.f32 %v1600, %v2050
  %v2293 = vmul.f32 %v1649, %v2065
  %v2294 = vmul.f32 %v1602, %v2080
  %v2295 = vmul.f32 %v1651, %v2095
  %v2296 = vmul.f32 %v1605, %v2110
  %v2297 = vmul.f32 %v1654, %v2125
  %v2298 = vmul.f32 %v1607, %v2140
  %v2299 = vmul.f32 %v1656, %v2155
  %v2300 = vmul.f32 %v1610, %v2170
  %v2301 = vmul.f32 %v1659, %v2185
  %v2302 = vmul.f32 %v1612, %v2200
  %v2303 = vmul.f32 %v1661, %v2215
  %v2304 = vmul.f32 %v1615, %v2230
  %v2305 = vmul.f32 %v1664, %v2245
  %v2306 = vmul.f32 %v1617, %v2260
  %v2307 = vmul.f32 %v1666, %v2275
  %v2308 = vpack.c.bf16 %v2278, %v2276
  %v2309 = vpack.c.bf16 %v2279, %v2277
  %v2310 = vpack.c.bf16 %v2282, %v2280
  %v2311 = vpack.c.bf16 %v2283, %v2281
  %v2312 = vpack.c.bf16 %v2286, %v2284
  %v2313 = vpack.c.bf16 %v2287, %v2285
  %v2314 = vpack.c.bf16 %v2290, %v2288
  %v2315 = vpack.c.bf16 %v2291, %v2289
  %v2316 = vpack.c.bf16 %v2294, %v2292
  %v2317 = vpack.c.bf16 %v2295, %v2293
  %v2318 = vpack.c.bf16 %v2298, %v2296
  %v2319 = vpack.c.bf16 %v2299, %v2297
  %v2320 = vpack.c.bf16 %v2302, %v2300
  %v2321 = vpack.c.bf16 %v2303, %v2301
  %v2322 = vpack.c.bf16 %v2306, %v2304
  %v2323 = vpack.c.bf16 %v2307, %v2305
  %2324 = vset.pattern.permute.xlu0 8
  %2325 = vperm.xlu0 %2324, %v23
  %v2326 = vpop.permute.xlu0 %2325
  %2328 = vset.pattern.permute.xlu0 8
  %2329 = vperm.xlu0 %2328, %v24
  %v2330 = vpop.permute.xlu0 %2329
  %2332 = vset.pattern.permute.xlu0 8
  %2333 = vperm.xlu0 %2332, %v25
  %v2334 = vpop.permute.xlu0 %2333
  %2336 = vset.pattern.permute.xlu0 8
  %2337 = vperm.xlu0 %2336, %v26
  %v2338 = vpop.permute.xlu0 %2337
  %2340 = vmatpush.bf16.msra.mxu0 %v2322
  %2341 = vmatpush.bf16.msra.mxu0 %v2320
  %2342 = vmatpush.bf16.msra.mxu0 %v2318
  %2343 = vmatpush.bf16.msra.mxu0 %v2316
  %2344 = vmatpush.bf16.msra.mxu0 %v2314
  %2345 = vmatpush.bf16.msra.mxu0 %v2312
  %2346 = vmatpush.bf16.msra.mxu0 %v2310
  %2347 = vmatpush.bf16.msra.mxu0 %v2308
  %2348 = vmatmul.bf16.gmra.mxu0 %v1336
  %v2349 = vpop.f32.mrf.mxu0
  %v2350 = vadd.f32 %v2326, %v2349
  %v2351 = vpop.f32.mrf.mxu0
  %v2352 = vadd.f32 %v2330, %v2351
  %2353 = vmatmul.bf16.gmra.mxu0 %v1337
  %v2354 = vpop.f32.mrf.mxu0
  %v2355 = vadd.f32 %v2334, %v2354
  %v2356 = vpop.f32.mrf.mxu0
  %v2357 = vadd.f32 %v2338, %v2356
  %2358 = vdwg.mxu0
  %2359 = vmatpush.bf16.msra.mxu0 %v2323
  %2360 = vmatpush.bf16.msra.mxu0 %v2321
  %2361 = vmatpush.bf16.msra.mxu0 %v2319
  %2362 = vmatpush.bf16.msra.mxu0 %v2317
  %2363 = vmatpush.bf16.msra.mxu0 %v2315
  %2364 = vmatpush.bf16.msra.mxu0 %v2313
  %2365 = vmatpush.bf16.msra.mxu0 %v2311
  %2366 = vmatpush.bf16.msra.mxu0 %v2309
  %2367 = vmatmul.bf16.gmra.mxu0 %v1336
  %v2368 = vpop.f32.mrf.mxu0
  %v2369 = vadd.f32 %v2326, %v2368
  %v2370 = vpop.f32.mrf.mxu0
  %v2371 = vadd.f32 %v2330, %v2370
  %2372 = vmatmul.bf16.gmra.mxu0 %v1337
  %v2373 = vpop.f32.mrf.mxu0
  %v2374 = vadd.f32 %v2334, %v2373
  %v2375 = vpop.f32.mrf.mxu0
  %v2376 = vadd.f32 %v2338, %v2375
  %2377 = vdwg.mxu0
  %v2378 = vadd.f32 %v1300, %v2350
  %v2379 = vadd.f32 %v1301, %v2369
  %v2380 = vadd.f32 %v1302, %v2352
  %v2381 = vadd.f32 %v1303, %v2371
  %v2382 = vadd.f32 %v1304, %v2355
  %v2383 = vadd.f32 %v1305, %v2374
  %v2384 = vadd.f32 %v1306, %v2357
  %v2385 = vadd.f32 %v1307, %v2376
  %v2386 = vxor.u32 %v2378, 2147483648
  %v2387 = vxor.u32 %v2379, 2147483648
  %v2388 = vxor.u32 %v2380, 2147483648
  %v2389 = vxor.u32 %v2381, 2147483648
  %v2390 = vxor.u32 %v2382, 2147483648
  %v2391 = vxor.u32 %v2383, 2147483648
  %v2392 = vxor.u32 %v2384, 2147483648
  %v2393 = vxor.u32 %v2385, 2147483648
  %v2394 = vmul.f32 %v2386, 1.442695
  %v2395 = vpow.pop %v2394
  %v2396 = vmul.f32 %v2387, 1.442695
  %v2397 = vpow.pop %v2396
  %v2398 = vmul.f32 %v2388, 1.442695
  %v2399 = vpow.pop %v2398
  %v2400 = vmul.f32 %v2389, 1.442695
  %v2401 = vpow.pop %v2400
  %v2402 = vmul.f32 %v2390, 1.442695
  %v2403 = vpow.pop %v2402
  %v2404 = vmul.f32 %v2391, 1.442695
  %v2405 = vpow.pop %v2404
  %v2406 = vmul.f32 %v2392, 1.442695
  %v2407 = vpow.pop %v2406
  %v2408 = vmul.f32 %v2393, 1.442695
  %v2409 = vpow.pop %v2408
  %v2410 = vadd.f32 %v2395, 1.0
  %v2411 = vadd.f32 %v2397, 1.0
  %v2412 = vadd.f32 %v2399, 1.0
  %v2413 = vadd.f32 %v2401, 1.0
  %v2414 = vadd.f32 %v2403, 1.0
  %v2415 = vadd.f32 %v2405, 1.0
  %v2416 = vadd.f32 %v2407, 1.0
  %v2417 = vadd.f32 %v2409, 1.0
  %v2418 = vrcp.pop %v2410
  %v2419 = vmul.f32 %v2410, %v2418
  %v2420 = vsub.f32 1.0, %v2419
  %v2421 = vmul.f32 %v2418, %v2420
  %v2422 = vadd.f32 %v2418, %v2421
  %vm2423 = vweird.f32 %v2410
  %vm2424 = vweird.f32 %v2418
  %vm2425 = vmor %vm2423, %vm2424
  %v2426 = vsel %vm2425, %v2418, %v2422
  %v2427 = vand.u32 2147483647, %v2410
  %vm2428 = vcmp.eq.f32.partialorder %v2427, 8.507059e+37
  %v2429 = vand.u32 %v2410, 2147483648
  %v2430 = vor.u32 1.1754944e-38, %v2429
  %v2431 = vsel %vm2428, %v2430, %v2426
  %v2432 = vmul.f32 1.0, %v2431
  %v2433 = vrcp.pop %v2411
  %v2434 = vmul.f32 %v2411, %v2433
  %v2435 = vsub.f32 1.0, %v2434
  %v2436 = vmul.f32 %v2433, %v2435
  %v2437 = vadd.f32 %v2433, %v2436
  %vm2438 = vweird.f32 %v2411
  %vm2439 = vweird.f32 %v2433
  %vm2440 = vmor %vm2438, %vm2439
  %v2441 = vsel %vm2440, %v2433, %v2437
  %v2442 = vand.u32 2147483647, %v2411
  %vm2443 = vcmp.eq.f32.partialorder %v2442, 8.507059e+37
  %v2444 = vand.u32 %v2411, 2147483648
  %v2445 = vor.u32 1.1754944e-38, %v2444
  %v2446 = vsel %vm2443, %v2445, %v2441
  %v2447 = vmul.f32 1.0, %v2446
  %v2448 = vrcp.pop %v2412
  %v2449 = vmul.f32 %v2412, %v2448
  %v2450 = vsub.f32 1.0, %v2449
  %v2451 = vmul.f32 %v2448, %v2450
  %v2452 = vadd.f32 %v2448, %v2451
  %vm2453 = vweird.f32 %v2412
  %vm2454 = vweird.f32 %v2448
  %vm2455 = vmor %vm2453, %vm2454
  %v2456 = vsel %vm2455, %v2448, %v2452
  %v2457 = vand.u32 2147483647, %v2412
  %vm2458 = vcmp.eq.f32.partialorder %v2457, 8.507059e+37
  %v2459 = vand.u32 %v2412, 2147483648
  %v2460 = vor.u32 1.1754944e-38, %v2459
  %v2461 = vsel %vm2458, %v2460, %v2456
  %v2462 = vmul.f32 1.0, %v2461
  %v2463 = vrcp.pop %v2413
  %v2464 = vmul.f32 %v2413, %v2463
  %v2465 = vsub.f32 1.0, %v2464
  %v2466 = vmul.f32 %v2463, %v2465
  %v2467 = vadd.f32 %v2463, %v2466
  %vm2468 = vweird.f32 %v2413
  %vm2469 = vweird.f32 %v2463
  %vm2470 = vmor %vm2468, %vm2469
  %v2471 = vsel %vm2470, %v2463, %v2467
  %v2472 = vand.u32 2147483647, %v2413
  %vm2473 = vcmp.eq.f32.partialorder %v2472, 8.507059e+37
  %v2474 = vand.u32 %v2413, 2147483648
  %v2475 = vor.u32 1.1754944e-38, %v2474
  %v2476 = vsel %vm2473, %v2475, %v2471
  %v2477 = vmul.f32 1.0, %v2476
  %v2478 = vrcp.pop %v2414
  %v2479 = vmul.f32 %v2414, %v2478
  %v2480 = vsub.f32 1.0, %v2479
  %v2481 = vmul.f32 %v2478, %v2480
  %v2482 = vadd.f32 %v2478, %v2481
  %vm2483 = vweird.f32 %v2414
  %vm2484 = vweird.f32 %v2478
  %vm2485 = vmor %vm2483, %vm2484
  %v2486 = vsel %vm2485, %v2478, %v2482
  %v2487 = vand.u32 2147483647, %v2414
  %vm2488 = vcmp.eq.f32.partialorder %v2487, 8.507059e+37
  %v2489 = vand.u32 %v2414, 2147483648
  %v2490 = vor.u32 1.1754944e-38, %v2489
  %v2491 = vsel %vm2488, %v2490, %v2486
  %v2492 = vmul.f32 1.0, %v2491
  %v2493 = vrcp.pop %v2415
  %v2494 = vmul.f32 %v2415, %v2493
  %v2495 = vsub.f32 1.0, %v2494
  %v2496 = vmul.f32 %v2493, %v2495
  %v2497 = vadd.f32 %v2493, %v2496
  %vm2498 = vweird.f32 %v2415
  %vm2499 = vweird.f32 %v2493
  %vm2500 = vmor %vm2498, %vm2499
  %v2501 = vsel %vm2500, %v2493, %v2497
  %v2502 = vand.u32 2147483647, %v2415
  %vm2503 = vcmp.eq.f32.partialorder %v2502, 8.507059e+37
  %v2504 = vand.u32 %v2415, 2147483648
  %v2505 = vor.u32 1.1754944e-38, %v2504
  %v2506 = vsel %vm2503, %v2505, %v2501
  %v2507 = vmul.f32 1.0, %v2506
  %v2508 = vrcp.pop %v2416
  %v2509 = vmul.f32 %v2416, %v2508
  %v2510 = vsub.f32 1.0, %v2509
  %v2511 = vmul.f32 %v2508, %v2510
  %v2512 = vadd.f32 %v2508, %v2511
  %vm2513 = vweird.f32 %v2416
  %vm2514 = vweird.f32 %v2508
  %vm2515 = vmor %vm2513, %vm2514
  %v2516 = vsel %vm2515, %v2508, %v2512
  %v2517 = vand.u32 2147483647, %v2416
  %vm2518 = vcmp.eq.f32.partialorder %v2517, 8.507059e+37
  %v2519 = vand.u32 %v2416, 2147483648
  %v2520 = vor.u32 1.1754944e-38, %v2519
  %v2521 = vsel %vm2518, %v2520, %v2516
  %v2522 = vmul.f32 1.0, %v2521
  %v2523 = vrcp.pop %v2417
  %v2524 = vmul.f32 %v2417, %v2523
  %v2525 = vsub.f32 1.0, %v2524
  %v2526 = vmul.f32 %v2523, %v2525
  %v2527 = vadd.f32 %v2523, %v2526
  %vm2528 = vweird.f32 %v2417
  %vm2529 = vweird.f32 %v2523
  %vm2530 = vmor %vm2528, %vm2529
  %v2531 = vsel %vm2530, %v2523, %v2527
  %v2532 = vand.u32 2147483647, %v2417
  %vm2533 = vcmp.eq.f32.partialorder %v2532, 8.507059e+37
  %v2534 = vand.u32 %v2417, 2147483648
  %v2535 = vor.u32 1.1754944e-38, %v2534
  %v2536 = vsel %vm2533, %v2535, %v2531
  %v2537 = vmul.f32 1.0, %v2536
  %v2538 = vmul.f32 %v2378, %v2432
  %v2539 = vmul.f32 %v2379, %v2447
  %v2540 = vmul.f32 %v2380, %v2462
  %v2541 = vmul.f32 %v2381, %v2477
  %v2542 = vmul.f32 %v2382, %v2492
  %v2543 = vmul.f32 %v2383, %v2507
  %v2544 = vmul.f32 %v2384, %v2522
  %v2545 = vmul.f32 %v2385, %v2537
  %v2546 = vpack.c.bf16 %v2540, %v2538
  %v2547 = vpack.c.bf16 %v2541, %v2539
  %v2548 = vpack.c.bf16 %v2544, %v2542
  %v2549 = vpack.c.bf16 %v2545, %v2543
  %2550 = vset.pattern.permute.xlu0 9
  %2551 = vperm.xlu0 %2550, %v23
  %v2552 = vpop.permute.xlu0 %2551
  %v2555 = vsel %vm467, %v22, 0
  %2557 = vmatpush.bf16.msra.mxu0 0
  %2558 = vmatpush.bf16.msra.mxu0 0
  %2559 = vmatpush.bf16.msra.mxu0 0
  %2560 = vmatpush.bf16.msra.mxu0 0
  %2561 = vmatpush.bf16.msra.mxu0 0
  %2562 = vmatpush.bf16.msra.mxu0 0
  %2563 = vmatpush.bf16.msra.mxu0 %v2548
  %2564 = vmatpush.bf16.msra.mxu0 %v2546
  %2565 = vmatmul.bf16.gmra.mxu0 %v2555
  %v2566 = vpop.f32.mrf.mxu0
  %v2567 = vadd.f32 %v2552, %v2566
  %v2568 = vpop.f32.mrf.mxu0
  %2569 = vdwg.mxu0
  %2570 = vmatpush.bf16.msra.mxu0 0
  %2571 = vmatpush.bf16.msra.mxu0 0
  %2572 = vmatpush.bf16.msra.mxu0 0
  %2573 = vmatpush.bf16.msra.mxu0 0
  %2574 = vmatpush.bf16.msra.mxu0 0
  %2575 = vmatpush.bf16.msra.mxu0 0
  %2576 = vmatpush.bf16.msra.mxu0 %v2549
  %2577 = vmatpush.bf16.msra.mxu0 %v2547
  %2578 = vmatmul.bf16.gmra.mxu0 %v2555
  %v2579 = vpop.f32.mrf.mxu0
  %v2580 = vadd.f32 %v2552, %v2579
  %v2581 = vpop.f32.mrf.mxu0
  %2582 = vdwg.mxu0
  %2583 = vxpose.xlu0.b32.start [1/16] %v2567, 128
  %2584 = vxpose.xlu0.b32.cont [2/16] 0.0, 128
  %2585 = vxpose.xlu0.b32.cont [3/16] 0.0, 128
  %2586 = vxpose.xlu0.b32.cont [4/16] 0.0, 128
  %2587 = vxpose.xlu0.b32.cont [5/16] 0.0, 128
  %2588 = vxpose.xlu0.b32.cont [6/16] 0.0, 128
  %2589 = vxpose.xlu0.b32.cont [7/16] 0.0, 128
  %2590 = vxpose.xlu0.b32.cont [8/16] 0.0, 128
  %2591 = vxpose.xlu0.b32.cont [9/16] 0.0, 128
  %2592 = vxpose.xlu0.b32.cont [10/16] 0.0, 128
  %2593 = vxpose.xlu0.b32.cont [11/16] 0.0, 128
  %2594 = vxpose.xlu0.b32.cont [12/16] 0.0, 128
  %2595 = vxpose.xlu0.b32.cont [13/16] 0.0, 128
  %2596 = vxpose.xlu0.b32.cont [14/16] 0.0, 128
  %2597 = vxpose.xlu0.b32.cont [15/16] 0.0, 128
  %2598 = vxpose.xlu0.b32.end [16/16] 0.0, 128
  %v2599 = vpop.trf.xlu0
  %v2600 = vpop.trf.xlu0
  %v2601 = vpop.trf.xlu0
  %v2602 = vpop.trf.xlu0
  %v2603 = vpop.trf.xlu0
  %v2604 = vpop.trf.xlu0
  %v2605 = vpop.trf.xlu0
  %v2606 = vpop.trf.xlu0
  %v2607 = vpop.trf.xlu0
  %v2608 = vpop.trf.xlu0
  %v2609 = vpop.trf.xlu0
  %v2610 = vpop.trf.xlu0
  %v2611 = vpop.trf.xlu0
  %v2612 = vpop.trf.xlu0
  %v2613 = vpop.trf.xlu0
  %v2614 = vpop.trf.xlu0
  %2615 = vxpose.xlu0.b32.start [1/16] %v2580, 128
  %2616 = vxpose.xlu0.b32.cont [2/16] 0.0, 128
  %2617 = vxpose.xlu0.b32.cont [3/16] 0.0, 128
  %2618 = vxpose.xlu0.b32.cont [4/16] 0.0, 128
  %2619 = vxpose.xlu0.b32.cont [5/16] 0.0, 128
  %2620 = vxpose.xlu0.b32.cont [6/16] 0.0, 128
  %2621 = vxpose.xlu0.b32.cont [7/16] 0.0, 128
  %2622 = vxpose.xlu0.b32.cont [8/16] 0.0, 128
  %2623 = vxpose.xlu0.b32.cont [9/16] 0.0, 128
  %2624 = vxpose.xlu0.b32.cont [10/16] 0.0, 128
  %2625 = vxpose.xlu0.b32.cont [11/16] 0.0, 128
  %2626 = vxpose.xlu0.b32.cont [12/16] 0.0, 128
  %2627 = vxpose.xlu0.b32.cont [13/16] 0.0, 128
  %2628 = vxpose.xlu0.b32.cont [14/16] 0.0, 128
  %2629 = vxpose.xlu0.b32.cont [15/16] 0.0, 128
  %2630 = vxpose.xlu0.b32.end [16/16] 0.0, 128
  %v2631 = vpop.trf.xlu0
  %v2632 = vpop.trf.xlu0
  %v2633 = vpop.trf.xlu0
  %v2634 = vpop.trf.xlu0
  %v2635 = vpop.trf.xlu0
  %v2636 = vpop.trf.xlu0
  %v2637 = vpop.trf.xlu0
  %v2638 = vpop.trf.xlu0
  %v2639 = vpop.trf.xlu0
  %v2640 = vpop.trf.xlu0
  %v2641 = vpop.trf.xlu0
  %v2642 = vpop.trf.xlu0
  %v2643 = vpop.trf.xlu0
  %v2644 = vpop.trf.xlu0
  %v2645 = vpop.trf.xlu0
  %v2646 = vpop.trf.xlu0
  %vm2647 = vcmask 64512
  %2648 = vst.msk [vmem:[%s3] sm:$0xff] %vm2647, %v2599
  %2649 = vst.msk [vmem:[%s3 + $0x8] sm:$0xff] %vm2647, %v2600
  %2650 = vst.msk [vmem:[%s3 + $0x10] sm:$0xff] %vm2647, %v2601
  %2651 = vst.msk [vmem:[%s3 + $0x18] sm:$0xff] %vm2647, %v2602
  %2652 = vst.msk [vmem:[%s3 + $0x20] sm:$0xff] %vm2647, %v2603
  %2653 = vst.msk [vmem:[%s3 + $0x28] sm:$0xff] %vm2647, %v2604
  %2654 = vst.msk [vmem:[%s3 + $0x30] sm:$0xff] %vm2647, %v2605
  %2655 = vst.msk [vmem:[%s3 + $0x38] sm:$0xff] %vm2647, %v2606
  %2656 = vst.msk [vmem:[%s3 + $0x40] sm:$0xff] %vm2647, %v2607
  %2657 = vst.msk [vmem:[%s3 + $0x48] sm:$0xff] %vm2647, %v2608
  %2658 = vst.msk [vmem:[%s3 + $0x50] sm:$0xff] %vm2647, %v2609
  %2659 = vst.msk [vmem:[%s3 + $0x58] sm:$0xff] %vm2647, %v2610
  %2660 = vst.msk [vmem:[%s3 + $0x60] sm:$0xff] %vm2647, %v2611
  %2661 = vst.msk [vmem:[%s3 + $0x68] sm:$0xff] %vm2647, %v2612
  %2662 = vst.msk [vmem:[%s3 + $0x70] sm:$0xff] %vm2647, %v2613
  %2663 = vst.msk [vmem:[%s3 + $0x78] sm:$0xff] %vm2647, %v2614
  %2664 = vst.msk [vmem:[%s3 + $0x80] sm:$0xff] %vm2647, %v2631
  %2665 = vst.msk [vmem:[%s3 + $0x88] sm:$0xff] %vm2647, %v2632
  %2666 = vst.msk [vmem:[%s3 + $0x90] sm:$0xff] %vm2647, %v2633
  %2667 = vst.msk [vmem:[%s3 + $0x98] sm:$0xff] %vm2647, %v2634
  %2668 = vst.msk [vmem:[%s3 + $0xa0] sm:$0xff] %vm2647, %v2635
  %2669 = vst.msk [vmem:[%s3 + $0xa8] sm:$0xff] %vm2647, %v2636
  %2670 = vst.msk [vmem:[%s3 + $0xb0] sm:$0xff] %vm2647, %v2637
  %2671 = vst.msk [vmem:[%s3 + $0xb8] sm:$0xff] %vm2647, %v2638
  %2672 = vst.msk [vmem:[%s3 + $0xc0] sm:$0xff] %vm2647, %v2639
  %2673 = vst.msk [vmem:[%s3 + $0xc8] sm:$0xff] %vm2647, %v2640
  %2674 = vst.msk [vmem:[%s3 + $0xd0] sm:$0xff] %vm2647, %v2641
  %2675 = vst.msk [vmem:[%s3 + $0xd8] sm:$0xff] %vm2647, %v2642
  %2676 = vst.msk [vmem:[%s3 + $0xe0] sm:$0xff] %vm2647, %v2643
  %2677 = vst.msk [vmem:[%s3 + $0xe8] sm:$0xff] %vm2647, %v2644
  %2678 = vst.msk [vmem:[%s3 + $0xf0] sm:$0xff] %vm2647, %v2645
  %2679 = vst.msk [vmem:[%s3 + $0xf8] sm:$0xff] %vm2647, %v2646
  // Predicated region
  $region14: #{tpu_custom_call.1} parent=0 // pred_check
    _
  $region15: #{tpu_custom_call.1} parent=0 // pred_check_branch
    %2681 = sbr.rel (0) target = $region17
  $region16: #{tpu_custom_call.1} parent=0 // pred_region
    _
  $region17: #{tpu_custom_call.1} parent=0 // pred_fallthru
    _
  // Predicated region
  $region18: #{tpu_custom_call.1} parent=0 // pred_check
    _
  $region19: #{tpu_custom_call.1} parent=0 // pred_check_branch
    %2683 = sbr.rel (0) target = $region21
  $region20: #{tpu_custom_call.1} parent=0 // pred_region
    _
  $region21: #{tpu_custom_call.1} parent=0 // pred_fallthru
    _

</llo_original>
